<compile_context>
chip_gen: v7x
topology: tpu7x:2x2x1
jax: 0.10.0
libtpu: 0.0.40
codegen_flags: <defaults>
</compile_context>

<pallas_src>
from functools import partial

import jax
import jax.numpy as jnp
from jax.experimental import pallas as pl
from jax.experimental.pallas import tpu as pltpu


def _round_up(v, m):
    return (v + m - 1) // m * m


def _vmem_limit_bytes():
    """Generation-aware scoped-VMEM budget: ~75% of physical per-core VMEM.

    v5e/v6e (128 MiB physical) -> 96 MiB; v7x (64 MiB physical) -> 48 MiB.
    Falls back to a v7x-safe 48 MiB if the query is unavailable.
    """
    try:
        cap = int(pltpu.get_tpu_info().vmem_capacity_bytes)
    except Exception:
        cap = 64 * 1024 * 1024
    return min(cap * 3 // 4, 100 * 1024 * 1024)


_VMEM_LIMIT = _vmem_limit_bytes()

# Max rows kept resident for the fused single-pass BatchNorm epilogue.
# Footprint ~= M * 3 KiB (double-buffered bf16 x tile + f32 accumulator + bf16
# output tiles), so the threshold is gated on the per-generation VMEM budget.
_BN_RESIDENT_MAX_M = int(min(8192, (_VMEM_LIMIT // 2) // 3072))


# --------------------------------------------------------------------------
# Pallas kernels
# --------------------------------------------------------------------------
def _mm_bias_act_kernel(x_ref, w_ref, b_ref, o_ref, acc_ref, *, act, slope):
    """Tiled matmul, f32 accumulation; epilogue = bias + {none|leaky|sigmoid}."""
    k = pl.program_id(2)

    @pl.when(k == 0)
    def _():
        acc_ref[...] = jnp.zeros_like(acc_ref)

    acc_ref[...] += jnp.dot(x_ref[...], w_ref[...],
                            preferred_element_type=jnp.float32)

    @pl.when(k == pl.num_programs(2) - 1)
    def _():
        y = acc_ref[...] + b_ref[...]
        if act == "leaky":
            y = jnp.maximum(y, slope * y)          # matches t.max(x, slope*x)
        elif act == "sigmoid":
            y = jax.nn.sigmoid(y)
        o_ref[...] = y.astype(o_ref.dtype)


def _mm_bn_leaky_kernel(x_ref, w_ref, g_ref, bt_ref, o_ref, acc_ref,
                        *, slope, eps, inv_rows):
    """Tiled matmul with fused training-mode BatchNorm + LeakyReLU epilogue.

    Requires the full set of rows (M) to be resident in this tile (Mt == 1),
    so per-channel batch statistics are exact.  Conv bias is dropped by the
    caller (it cancels exactly under batch-mean subtraction).
    """
    k = pl.program_id(2)

    @pl.when(k == 0)
    def _():
        acc_ref[...] = jnp.zeros_like(acc_ref)

    acc_ref[...] += jnp.dot(x_ref[...], w_ref[...],
                            preferred_element_type=jnp.float32)

    @pl.when(k == pl.num_programs(2) - 1)
    def _():
        acc = acc_ref[...]
        mean = jnp.sum(acc, axis=0, keepdims=True) * inv_rows
        diff = acc - mean
        var = jnp.sum(diff * diff, axis=0, keepdims=True) * inv_rows  # biased
        y = diff * jax.lax.rsqrt(var + eps) * g_ref[...] + bt_ref[...]
        o_ref[...] = jnp.maximum(y, slope * y).astype(o_ref.dtype)


def _bn_stats_kernel(x_ref, sum_ref, sq_ref):
    """Pass 1 of tiled BN fallback: per-channel sum / sum-of-squares."""
    @pl.when(pl.program_id(0) == 0)
    def _():
        sum_ref[...] = jnp.zeros_like(sum_ref)
        sq_ref[...] = jnp.zeros_like(sq_ref)

    xv = x_ref[...].astype(jnp.float32)
    sum_ref[...] += jnp.sum(xv, axis=0, keepdims=True)
    sq_ref[...] += jnp.sum(xv * xv, axis=0, keepdims=True)


def _scale_shift_leaky_kernel(x_ref, sc_ref, sh_ref, o_ref, *, slope):
    """Pass 2 of tiled BN fallback: y = x*scale + shift, then LeakyReLU."""
    y = x_ref[...].astype(jnp.float32) * sc_ref[...] + sh_ref[...]
    o_ref[...] = jnp.maximum(y, slope * y).astype(o_ref.dtype)


# --------------------------------------------------------------------------
# Wrappers
# --------------------------------------------------------------------------
def _pick_tiles(Kp, Np, *, allow_tk512):
    # K tile: 256-aligned matches the 2x256^2 MXU on v6e/v7x; 512 halves k-steps
    # on deep contractions (weights stay small) but is skipped on the resident-BN
    # path to bound the VMEM footprint.
    if allow_tk512 and Kp % 512 == 0 and Kp >= 1024:
        tk = 512
    elif Kp % 256 == 0:
        tk = 256
    else:
        tk = 128
    # Prefer >=2 lane-dense blocks on the 'parallel' N axis (v7x has 2 TCs).
    tn = 256 if (Np % 256 == 0 and Np >= 512) else 128
    return tk, tn


def fused_matmul(x, w, *, mode, bias=None, gamma=None, beta=None,
                 slope=0.01, eps=1e-5, out_dtype=jnp.bfloat16):
    """y = epilogue(x @ w);  mode in {"none", "leaky", "sigmoid", "bn_leaky"}.

    x is expected bf16 with K already a multiple of 128 (callers arrange this,
    so no extra HBM pad pass over the large operand is needed); w may be f32 and
    is cast/padded here (it is small).  N is zero-padded to a multiple of 128 so
    every store is lane-dense; the result is returned still channel-padded
    (M, Np).  Accumulation and the epilogue stay in f32.
    """
    M, K = x.shape
    Kw, N = w.shape
    assert K == Kw
    Kp, Np = _round_up(K, 128), _round_up(N, 128)

    if mode == "bn_leaky" and M > _BN_RESIDENT_MAX_M:
        # Rows don't fit a single resident tile: tiled conv + two-pass tiled BN.
        y = fused_matmul(x, w, mode="none", out_dtype=jnp.bfloat16)
        return bn_leaky_tiled(y, gamma, beta, slope=slope, eps=eps,
                              out_dtype=out_dtype)

    tk, tn = _pick_tiles(Kp, Np, allow_tk512=(mode != "bn_leaky"))

    if mode == "bn_leaky" or M <= 512:
        tm, Mp = M, M                      # full-extent M block (always legal)
    else:
        tm = 512                           # bigger tile: fewer grid steps, >=2 M blocks
        Mp = _round_up(M, tm)
    if mode == "bn_leaky":
        # Batch statistics must not include padded rows.
        assert Mp == M

    xb = x.astype(jnp.bfloat16)
    if (Mp, Kp) != (M, K):
        xb = jnp.pad(xb, ((0, Mp - M), (0, Kp - K)))
    wb = jnp.pad(w.astype(jnp.bfloat16), ((0, Kp - K), (0, Np - N)))

    grid = (Mp // tm, Np // tn, Kp // tk)
    x_spec = pl.BlockSpec((tm, tk), lambda i, j, k: (i, k))
    w_spec = pl.BlockSpec((tk, tn), lambda i, j, k: (k, j))
    col_spec = pl.BlockSpec((1, tn), lambda i, j, k: (0, j))
    out_spec = pl.BlockSpec((tm, tn), lambda i, j, k: (i, j))
    cparams = pltpu.CompilerParams(
        dimension_semantics=("parallel", "parallel", "arbitrary"),
        vmem_limit_bytes=_VMEM_LIMIT)

    if mode == "bn_leaky":
        g = jnp.pad(gamma.astype(jnp.float32).reshape(1, N),
                    ((0, 0), (0, Np - N)), constant_values=1.0)
        bt = jnp.pad(beta.astype(jnp.float32).reshape(1, N),
                     ((0, 0), (0, Np - N)))
        kernel = partial(_mm_bn_leaky_kernel, slope=slope, eps=eps,
                         inv_rows=1.0 / M)
        extras, extra_specs = (g, bt), [col_spec, col_spec]
    else:
        b = (jnp.zeros((1, N), jnp.float32) if bias is None
             else bias.astype(jnp.float32).reshape(1, N))
        b = jnp.pad(b, ((0, 0), (0, Np - N)))
        kernel = partial(_mm_bias_act_kernel, act=mode, slope=slope)
        extras, extra_specs = (b,), [col_spec]

    out = pl.pallas_call(
        kernel,
        out_shape=jax.ShapeDtypeStruct((Mp, Np), out_dtype),
        grid=grid,
        in_specs=[x_spec, w_spec] + extra_specs,
        out_specs=out_spec,
        scratch_shapes=[pltpu.VMEM((tm, tn), jnp.float32)],
        compiler_params=cparams,
    )(xb, wb, *extras)
    return out[:M] if Mp != M else out


def bn_leaky_tiled(x, gamma, beta, *, slope=0.01, eps=1e-5,
                   out_dtype=jnp.bfloat16):
    """Training-mode BatchNorm + LeakyReLU, tiled over rows (two-pass fallback).

    Only taken when M exceeds the resident-BN threshold.  Zero-padded rows do
    not perturb the statistics (E[x^2] - mean^2 formulation, division by real M).
    """
    M, Np = x.shape
    N = gamma.shape[0]
    if M <= 512:
        tm, Mp = M, M
    else:
        tm = 512
        Mp = _round_up(M, tm)
    xb = jnp.pad(x, ((0, Mp - M), (0, 0)))
    grid = (Mp // tm,)

    s, sq = pl.pallas_call(
        _bn_stats_kernel,
        out_shape=(jax.ShapeDtypeStruct((1, Np), jnp.float32),
                   jax.ShapeDtypeStruct((1, Np), jnp.float32)),
        grid=grid,
        in_specs=[pl.BlockSpec((tm, Np), lambda i: (i, 0))],
        out_specs=[pl.BlockSpec((1, Np), lambda i: (0, 0)),
                   pl.BlockSpec((1, Np), lambda i: (0, 0))],
        compiler_params=pltpu.CompilerParams(
            dimension_semantics=("arbitrary",), vmem_limit_bytes=_VMEM_LIMIT),
    )(xb)

    mean = s / M
    var = sq / M - mean * mean                       # biased variance
    g = jnp.pad(gamma.astype(jnp.float32).reshape(1, N),
                ((0, 0), (0, Np - N)), constant_values=1.0)
    bt = jnp.pad(beta.astype(jnp.float32).reshape(1, N), ((0, 0), (0, Np - N)))
    scale = jax.lax.rsqrt(var + eps) * g
    shift = bt - mean * scale

    out = pl.pallas_call(
        partial(_scale_shift_leaky_kernel, slope=slope),
        out_shape=jax.ShapeDtypeStruct((Mp, Np), out_dtype),
        grid=grid,
        in_specs=[pl.BlockSpec((tm, Np), lambda i: (i, 0)),
                  pl.BlockSpec((1, Np), lambda i: (0, 0)),
                  pl.BlockSpec((1, Np), lambda i: (0, 0))],
        out_specs=pl.BlockSpec((tm, Np), lambda i: (i, 0)),
        compiler_params=pltpu.CompilerParams(
            dimension_semantics=("parallel",), vmem_limit_bytes=_VMEM_LIMIT),
    )(xb, scale, shift)
    return out[:M] if Mp != M else out


def conv2d_pallas(x_nhwc, weight, *, bias=None, gamma=None, beta=None,
                  stride=2, pad=1, mode="leaky", slope=0.01, eps=1e-5):
    """Conv2d(k=4, s=2, p=1) + fused epilogue.

    x_nhwc: (B, H, W, C) NHWC bf16; trailing channels beyond weight.shape[1] are
            lane-padding carried between layers and are sliced off here so the
            matmul contraction K is not inflated 8-16x.
    weight: PyTorch layout (Cout, Cin_real, kh, kw);  bias: (Cout,) or None.
    mode:   "leaky"    -> conv + bias + LeakyReLU
            "bn_leaky" -> conv + BatchNorm(batch stats) + LeakyReLU (bias
                          dropped: it cancels under batch-mean subtraction)
    Returns (B, Ho, Wo, Cout_padded_to_128) bf16.
    """
    B, H, W, Cin_carried = x_nhwc.shape
    Cout, Cin_real, kh, kw = weight.shape
    assert Cin_real <= Cin_carried
    Ho = (H + 2 * pad - kh) // stride + 1
    Wo = (W + 2 * pad - kw) // stride + 1

    # Real channels only, padded up to a multiple of 8 so K = kh*kw*Cin8 is a
    # multiple of 128 (full MXU depth, no later pad pass over the patch matrix).
    Cin8 = _round_up(Cin_real, 8)
    x = x_nhwc[..., :Cin_real].astype(jnp.bfloat16)
    xp = jnp.pad(x, ((0, 0), (pad, pad), (pad, pad), (0, Cin8 - Cin_real)))

    # TODO(synk): fuse this patch extraction into the kernel (space-to-depth +
    # per-tap accumulation over the K grid axis / manual strided DMA) so the
    # im2col matrix is never materialized in HBM.
    taps = []
    for i in range(kh):
        for j in range(kw):
            taps.append(xp[:, i:i + stride * Ho:stride, j:j + stride * Wo:stride, :])
    pat = jnp.stack(taps, axis=3).reshape(B * Ho * Wo, kh * kw * Cin8)

    # weight -> (kh, kw, Cin8, Cout), zero rows for the padded input channels.
    w4 = jnp.transpose(weight, (2, 3, 1, 0))
    w4 = jnp.pad(w4, ((0, 0), (0, 0), (0, Cin8 - Cin_real), (0, 0)))
    wmat = w4.reshape(kh * kw * Cin8, Cout)

    out = fused_matmul(pat, wmat, mode=mode, bias=bias, gamma=gamma, beta=beta,
                       slope=slope, eps=eps, out_dtype=jnp.bfloat16)
    return out.reshape(B, Ho, Wo, out.shape[1])


# --------------------------------------------------------------------------
# Discriminator
# --------------------------------------------------------------------------
def init_discriminator_params(key, img_size, img_channels, hidden_channels):
    n_layers = len(hidden_channels)
    assert img_size % (2 ** n_layers) == 0
    channels = [img_channels] + list(hidden_channels)
    params = {}
    keys = jax.random.split(key, 2 * n_layers + 2)
    for i in range(n_layers):
        cin, cout = channels[i], channels[i + 1]
        params[f"conv{i}_w"] = 0.05 * jax.random.normal(
            keys[2 * i], (cout, cin, 4, 4), jnp.float32)
        params[f"conv{i}_b"] = 0.01 * jax.random.normal(
            keys[2 * i + 1], (cout,), jnp.float32)
        if i != 0 and i != n_layers - 1:
            params[f"bn{i}_g"] = jnp.ones((cout,), jnp.float32)
            params[f"bn{i}_b"] = jnp.zeros((cout,), jnp.float32)
    in_features = (img_size // 2 ** n_layers) ** 2 * hidden_channels[-1]
    params["lin_w"] = 0.05 * jax.random.normal(keys[-2], (1, in_features), jnp.float32)
    params["lin_b"] = 0.01 * jax.random.normal(keys[-1], (1,), jnp.float32)
    return params


def discriminator_forward(params, x_nchw, hidden_channels):
    n_layers = len(hidden_channels)
    x = jnp.transpose(x_nchw, (0, 2, 3, 1)).astype(jnp.bfloat16)   # NCHW -> NHWC
    for i in range(n_layers):
        has_bn = (i != 0 and i != n_layers - 1)
        if has_bn:
            # Conv bias dropped: it cancels exactly under batch-mean subtraction.
            x = conv2d_pallas(x, params[f"conv{i}_w"],
                              gamma=params[f"bn{i}_g"], beta=params[f"bn{i}_b"],
                              mode="bn_leaky")
        else:
            x = conv2d_pallas(x, params[f"conv{i}_w"], bias=params[f"conv{i}_b"],
                              mode="leaky")

    # Final linear head fed straight from the NHWC (channel-padded) layout:
    # reorder the small weight (c,h,w)->(h,w,c) + zero-pad its channels instead
    # of transposing the large activation back to NCHW in HBM.
    # TODO(synk): fold this (B, HWC)@(HWC,1)+sigmoid head into the last conv's
    # epilogue as a cross-tile reduction to remove a kernel launch + HBM pass.
    B, Ho, Wo, Cp = x.shape
    flat = x.reshape(B, Ho * Wo * Cp)                               # K multiple of 128

    C_last = hidden_channels[-1]
    lw = params["lin_w"].reshape(C_last, Ho, Wo)
    lw = jnp.transpose(lw, (1, 2, 0))                               # (Ho, Wo, C)
    lw = jnp.pad(lw, ((0, 0), (0, 0), (0, Cp - C_last)))            # zero rows for pad channels
    lw = lw.reshape(Ho * Wo * Cp, 1)

    out = fused_matmul(flat, lw, mode="sigmoid",
                       bias=params["lin_b"].reshape(1, 1),
                       out_dtype=jnp.float32)
    return out[:, :1]                                               # (B, 1) probabilities


# --------------------------------------------------------------------------
# Pure-JAX reference (f32) for a loose numerical check
# --------------------------------------------------------------------------
def _reference_forward(params, x_nchw, hidden_channels):
    n_layers = len(hidden_channels)
    x = x_nchw.astype(jnp.float32)
    for i in range(n_layers):
        w = params[f"conv{i}_w"]
        b = params[f"conv{i}_b"].reshape(1, -1, 1, 1)
        x = jax.lax.conv_general_dilated(
            x, w, window_strides=(2, 2), padding=((1, 1), (1, 1)),
            dimension_numbers=("NCHW", "OIHW", "NCHW")) + b
        if i != 0 and i != n_layers - 1:
            mean = jnp.mean(x, axis=(0, 2, 3), keepdims=True)
            var = jnp.var(x, axis=(0, 2, 3), keepdims=True)         # biased
            g = params[f"bn{i}_g"].reshape(1, -1, 1, 1)
            bt = params[f"bn{i}_b"].reshape(1, -1, 1, 1)
            x = (x - mean) * jax.lax.rsqrt(var + 1e-5) * g + bt
        x = jnp.maximum(x, 0.01 * x)
    flat = x.reshape(x.shape[0], -1)
    logits = flat @ params["lin_w"].T + params["lin_b"]
    return jax.nn.sigmoid(logits)


# --------------------------------------------------------------------------
# Main
# --------------------------------------------------------------------------
if __name__ == "__main__":
    img_size, img_channels = 16, 4
    hidden_channels = [8, 16, 32]
    batch = 2

    key = jax.random.PRNGKey(0)
    k_param, k_x = jax.random.split(key)
    params = init_discriminator_params(k_param, img_size, img_channels, hidden_channels)
    x = jax.random.normal(k_x, (batch, img_channels, img_size, img_size), jnp.float32)

    fwd = jax.jit(partial(discriminator_forward, hidden_channels=tuple(hidden_channels)))
    out = jax.block_until_ready(fwd(params, x))

    assert out.shape == (batch, 1)
    assert bool(jnp.all((out >= 0.0) & (out <= 1.0)))

    # Loose check vs. an f32 reference (kernel matmuls run in bf16 w/ f32 accum).
    ref = _reference_forward(params, x, hidden_channels)
    max_err = float(jnp.max(jnp.abs(out - ref)))
    assert max_err < 0.1, f"mismatch vs f32 reference: {max_err}"

    print("KERNEL_OK")
</pallas_src>

<mosaic_0001>
module attributes {stable_mosaic.version = 11 : i64} {
  func.func @_mm_bias_act_kernel(%arg0: i32, %arg1: i32, %arg2: i32, %arg3: memref<128x128xbf16, #tpu.memory_space<vmem>>, %arg4: memref<128x128xbf16, #tpu.memory_space<vmem>>, %arg5: memref<1x128xf32, #tpu.memory_space<vmem>>, %arg6: memref<128x128xbf16, #tpu.memory_space<vmem>>, %arg7: memref<128x128xf32, #tpu.memory_space<vmem>>) attributes {dimension_semantics = [#tpu.dimension_semantics<parallel>, #tpu.dimension_semantics<parallel>, #tpu.dimension_semantics<arbitrary>], iteration_bounds = array<i64: 1, 1, 1>, scalar_prefetch = 0 : i64, scratch_operands = 1 : i64, tpu.core_type = #tpu.core_type<tc>, window_params = [{transform_indices = @transform_0, window_bounds = array<i64: 128, 128>}, {transform_indices = @transform_1, window_bounds = array<i64: 128, 128>}, {transform_indices = @transform_2, window_bounds = array<i64: 1, 128>}, {transform_indices = @transform_3, window_bounds = array<i64: 128, 128>}]} {
    %c0_i32 = arith.constant 0 : i32
    %0 = arith.cmpi eq, %arg2, %c0_i32 : i32
    %1 = arith.extui %0 : i1 to i32
    %c0_i32_0 = arith.constant 0 : i32
    %2 = arith.cmpi ne, %1, %c0_i32_0 : i32
    scf.if %2 {
      %cst_10 = arith.constant 0.000000e+00 : f32
      %12 = vector.broadcast %cst_10 : f32 to vector<128x128xf32>
      %c0_11 = arith.constant 0 : index
      %c0_12 = arith.constant 0 : index
      %13 = vector.load %arg7[%c0_11, %c0_12] : memref<128x128xf32, #tpu.memory_space<vmem>>, vector<128x128xf32>
      tpu.vector_store %arg7[%c0_11, %c0_12], %12 {strides = array<i32>} : memref<128x128xf32, #tpu.memory_space<vmem>>, vector<128x128xf32>,
    } else {
    }
    %c0 = arith.constant 0 : index
    %c0_1 = arith.constant 0 : index
    %3 = vector.load %arg7[%c0, %c0_1] : memref<128x128xf32, #tpu.memory_space<vmem>>, vector<128x128xf32>
    %c0_2 = arith.constant 0 : index
    %c0_3 = arith.constant 0 : index
    %4 = vector.load %arg3[%c0_2, %c0_3] : memref<128x128xbf16, #tpu.memory_space<vmem>>, vector<128x128xbf16>
    %c0_4 = arith.constant 0 : index
    %c0_5 = arith.constant 0 : index
    %5 = vector.load %arg4[%c0_4, %c0_5] : memref<128x128xbf16, #tpu.memory_space<vmem>>, vector<128x128xbf16>
    %cst = arith.constant dense<0.000000e+00> : vector<128x128xf32>
    %6 = tpu.matmul %4, %5, %cst {dimension_numbers = #tpu.dot_dimension_numbers<[1], [0], [0], [1], [0, 0, 1, 1], [], []>} : vector<128x128xbf16>, vector<128x128xbf16>, vector<128x128xf32> -> vector<128x128xf32>
    %7 = arith.addf %3, %6 : vector<128x128xf32>
    %c0_6 = arith.constant 0 : index
    %c0_7 = arith.constant 0 : index
    %8 = vector.load %arg7[%c0_6, %c0_7] : memref<128x128xf32, #tpu.memory_space<vmem>>, vector<128x128xf32>
    tpu.vector_store %arg7[%c0_6, %c0_7], %7 {strides = array<i32>} : memref<128x128xf32, #tpu.memory_space<vmem>>, vector<128x128xf32>,
    %c0_i32_8 = arith.constant 0 : i32
    %9 = arith.cmpi eq, %arg2, %c0_i32_8 : i32
    %10 = arith.extui %9 : i1 to i32
    %c0_i32_9 = arith.constant 0 : i32
    %11 = arith.cmpi ne, %10, %c0_i32_9 : i32
    scf.if %11 {
      %c0_10 = arith.constant 0 : index
      %c0_11 = arith.constant 0 : index
      %12 = vector.load %arg7[%c0_10, %c0_11] : memref<128x128xf32, #tpu.memory_space<vmem>>, vector<128x128xf32>
      %c0_12 = arith.constant 0 : index
      %c0_13 = arith.constant 0 : index
      %13 = vector.load %arg5[%c0_12, %c0_13] : memref<1x128xf32, #tpu.memory_space<vmem>>, vector<1x128xf32>
      %14 = vector.broadcast %13 : vector<1x128xf32> to vector<128x128xf32>
      %15 = arith.addf %12, %14 : vector<128x128xf32>
      %cst_14 = arith.constant 0.00999999977 : f32
      %16 = vector.broadcast %cst_14 : f32 to vector<128x128xf32>
      %17 = arith.mulf %16, %15 : vector<128x128xf32>
      %18 = arith.maximumf %15, %17 : vector<128x128xf32>
      %19 = arith.truncf %18 : vector<128x128xf32> to vector<128x128xbf16>
      %c0_15 = arith.constant 0 : index
      %c0_16 = arith.constant 0 : index
      %20 = vector.load %arg6[%c0_15, %c0_16] : memref<128x128xbf16, #tpu.memory_space<vmem>>, vector<128x128xbf16>
      tpu.vector_store %arg6[%c0_15, %c0_16], %19 {strides = array<i32>} : memref<128x128xbf16, #tpu.memory_space<vmem>>, vector<128x128xbf16>,
    } else {
    }
    return
  }
  func.func @transform_0(%arg0: i32, %arg1: i32, %arg2: i32) -> (i32, i32) {
    %c0_i32 = arith.constant 0 : i32
    return %arg0, %arg2 : i32, i32
  }
  func.func @transform_1(%arg0: i32, %arg1: i32, %arg2: i32) -> (i32, i32) {
    %c0_i32 = arith.constant 0 : i32
    return %arg2, %arg1 : i32, i32
  }
  func.func @transform_2(%arg0: i32, %arg1: i32, %arg2: i32) -> (i32, i32) {
    %c0_i32 = arith.constant 0 : i32
    %c0_i32_0 = arith.constant 0 : i32
    return %c0_i32, %arg1 : i32, i32
  }
  func.func @transform_3(%arg0: i32, %arg1: i32, %arg2: i32) -> (i32, i32) {
    %c0_i32 = arith.constant 0 : i32
    return %arg0, %arg1 : i32, i32
  }
}

module attributes {stable_mosaic.version = 11 : i64} {
  func.func @_mm_bn_leaky_kernel(%arg0: i32, %arg1: i32, %arg2: i32, %arg3: memref<32x128xbf16, #tpu.memory_space<vmem>>, %arg4: memref<128x128xbf16, #tpu.memory_space<vmem>>, %arg5: memref<1x128xf32, #tpu.memory_space<vmem>>, %arg6: memref<1x128xf32, #tpu.memory_space<vmem>>, %arg7: memref<32x128xbf16, #tpu.memory_space<vmem>>, %arg8: memref<32x128xf32, #tpu.memory_space<vmem>>) attributes {dimension_semantics = [#tpu.dimension_semantics<parallel>, #tpu.dimension_semantics<parallel>, #tpu.dimension_semantics<arbitrary>], iteration_bounds = array<i64: 1, 1, 1>, scalar_prefetch = 0 : i64, scratch_operands = 1 : i64, tpu.core_type = #tpu.core_type<tc>, window_params = [{transform_indices = @transform_0, window_bounds = array<i64: 32, 128>}, {transform_indices = @transform_1, window_bounds = array<i64: 128, 128>}, {transform_indices = @transform_2, window_bounds = array<i64: 1, 128>}, {transform_indices = @transform_3, window_bounds = array<i64: 1, 128>}, {transform_indices = @transform_4, window_bounds = array<i64: 32, 128>}]} {
    %c0_i32 = arith.constant 0 : i32
    %0 = arith.cmpi eq, %arg2, %c0_i32 : i32
    %1 = arith.extui %0 : i1 to i32
    %c0_i32_0 = arith.constant 0 : i32
    %2 = arith.cmpi ne, %1, %c0_i32_0 : i32
    scf.if %2 {
      %cst_10 = arith.constant 0.000000e+00 : f32
      %12 = vector.broadcast %cst_10 : f32 to vector<32x128xf32>
      %c0_11 = arith.constant 0 : index
      %c0_12 = arith.constant 0 : index
      %13 = vector.load %arg8[%c0_11, %c0_12] : memref<32x128xf32, #tpu.memory_space<vmem>>, vector<32x128xf32>
      tpu.vector_store %arg8[%c0_11, %c0_12], %12 {strides = array<i32>} : memref<32x128xf32, #tpu.memory_space<vmem>>, vector<32x128xf32>,
    } else {
    }
    %c0 = arith.constant 0 : index
    %c0_1 = arith.constant 0 : index
    %3 = vector.load %arg8[%c0, %c0_1] : memref<32x128xf32, #tpu.memory_space<vmem>>, vector<32x128xf32>
    %c0_2 = arith.constant 0 : index
    %c0_3 = arith.constant 0 : index
    %4 = vector.load %arg3[%c0_2, %c0_3] : memref<32x128xbf16, #tpu.memory_space<vmem>>, vector<32x128xbf16>
    %c0_4 = arith.constant 0 : index
    %c0_5 = arith.constant 0 : index
    %5 = vector.load %arg4[%c0_4, %c0_5] : memref<128x128xbf16, #tpu.memory_space<vmem>>, vector<128x128xbf16>
    %cst = arith.constant dense<0.000000e+00> : vector<32x128xf32>
    %6 = tpu.matmul %4, %5, %cst {dimension_numbers = #tpu.dot_dimension_numbers<[1], [0], [0], [1], [0, 0, 1, 1], [], []>} : vector<32x128xbf16>, vector<128x128xbf16>, vector<32x128xf32> -> vector<32x128xf32>
    %7 = arith.addf %3, %6 : vector<32x128xf32>
    %c0_6 = arith.constant 0 : index
    %c0_7 = arith.constant 0 : index
    %8 = vector.load %arg8[%c0_6, %c0_7] : memref<32x128xf32, #tpu.memory_space<vmem>>, vector<32x128xf32>
    tpu.vector_store %arg8[%c0_6, %c0_7], %7 {strides = array<i32>} : memref<32x128xf32, #tpu.memory_space<vmem>>, vector<32x128xf32>,
    %c0_i32_8 = arith.constant 0 : i32
    %9 = arith.cmpi eq, %arg2, %c0_i32_8 : i32
    %10 = arith.extui %9 : i1 to i32
    %c0_i32_9 = arith.constant 0 : i32
    %11 = arith.cmpi ne, %10, %c0_i32_9 : i32
    scf.if %11 {
      %c0_10 = arith.constant 0 : index
      %c0_11 = arith.constant 0 : index
      %12 = vector.load %arg8[%c0_10, %c0_11] : memref<32x128xf32, #tpu.memory_space<vmem>>, vector<32x128xf32>
      %cst_12 = arith.constant dense<0.000000e+00> : vector<128xf32>
      %13 = vector.multi_reduction <add>, %12, %cst_12 [0] : vector<32x128xf32> to vector<128xf32>
      %14 = vector.shape_cast %13 : vector<128xf32> to vector<1x128xf32>
      %cst_13 = arith.constant 3.125000e-02 : f32
      %15 = vector.broadcast %cst_13 : f32 to vector<1x128xf32>
      %16 = arith.mulf %14, %15 : vector<1x128xf32>
      %17 = vector.broadcast %16 : vector<1x128xf32> to vector<32x128xf32>
      %18 = arith.subf %12, %17 : vector<32x128xf32>
      %19 = arith.mulf %18, %18 : vector<32x128xf32>
      %cst_14 = arith.constant dense<0.000000e+00> : vector<128xf32>
      %20 = vector.multi_reduction <add>, %19, %cst_14 [0] : vector<32x128xf32> to vector<128xf32>
      %21 = vector.shape_cast %20 : vector<128xf32> to vector<1x128xf32>
      %cst_15 = arith.constant 3.125000e-02 : f32
      %22 = vector.broadcast %cst_15 : f32 to vector<1x128xf32>
      %23 = arith.mulf %21, %22 : vector<1x128xf32>
      %cst_16 = arith.constant 9.99999974E-6 : f32
      %24 = vector.broadcast %cst_16 : f32 to vector<1x128xf32>
      %25 = arith.addf %23, %24 : vector<1x128xf32>
      %26 = math.rsqrt %25 : vector<1x128xf32>
      %27 = vector.broadcast %26 : vector<1x128xf32> to vector<32x128xf32>
      %28 = arith.mulf %18, %27 : vector<32x128xf32>
      %c0_17 = arith.constant 0 : index
      %c0_18 = arith.constant 0 : index
      %29 = vector.load %arg5[%c0_17, %c0_18] : memref<1x128xf32, #tpu.memory_space<vmem>>, vector<1x128xf32>
      %30 = vector.broadcast %29 : vector<1x128xf32> to vector<32x128xf32>
      %31 = arith.mulf %28, %30 : vector<32x128xf32>
      %c0_19 = arith.constant 0 : index
      %c0_20 = arith.constant 0 : index
      %32 = vector.load %arg6[%c0_19, %c0_20] : memref<1x128xf32, #tpu.memory_space<vmem>>, vector<1x128xf32>
      %33 = vector.broadcast %32 : vector<1x128xf32> to vector<32x128xf32>
      %34 = arith.addf %31, %33 : vector<32x128xf32>
      %cst_21 = arith.constant 0.00999999977 : f32
      %35 = vector.broadcast %cst_21 : f32 to vector<32x128xf32>
      %36 = arith.mulf %35, %34 : vector<32x128xf32>
      %37 = arith.maximumf %34, %36 : vector<32x128xf32>
      %38 = arith.truncf %37 : vector<32x128xf32> to vector<32x128xbf16>
      %c0_22 = arith.constant 0 : index
      %c0_23 = arith.constant 0 : index
      %39 = vector.load %arg7[%c0_22, %c0_23] : memref<32x128xbf16, #tpu.memory_space<vmem>>, vector<32x128xbf16>
      tpu.vector_store %arg7[%c0_22, %c0_23], %38 {strides = array<i32>} : memref<32x128xbf16, #tpu.memory_space<vmem>>, vector<32x128xbf16>,
    } else {
    }
    return
  }
  func.func @transform_0(%arg0: i32, %arg1: i32, %arg2: i32) -> (i32, i32) {
    %c0_i32 = arith.constant 0 : i32
    return %arg0, %arg2 : i32, i32
  }
  func.func @transform_1(%arg0: i32, %arg1: i32, %arg2: i32) -> (i32, i32) {
    %c0_i32 = arith.constant 0 : i32
    return %arg2, %arg1 : i32, i32
  }
  func.func @transform_2(%arg0: i32, %arg1: i32, %arg2: i32) -> (i32, i32) {
    %c0_i32 = arith.constant 0 : i32
    %c0_i32_0 = arith.constant 0 : i32
    return %c0_i32, %arg1 : i32, i32
  }
  func.func @transform_3(%arg0: i32, %arg1: i32, %arg2: i32) -> (i32, i32) {
    %c0_i32 = arith.constant 0 : i32
    %c0_i32_0 = arith.constant 0 : i32
    return %c0_i32, %arg1 : i32, i32
  }
  func.func @transform_4(%arg0: i32, %arg1: i32, %arg2: i32) -> (i32, i32) {
    %c0_i32 = arith.constant 0 : i32
    return %arg0, %arg1 : i32, i32
  }
}

module attributes {stable_mosaic.version = 11 : i64} {
  func.func @_mm_bias_act_kernel(%arg0: i32, %arg1: i32, %arg2: i32, %arg3: memref<8x256xbf16, #tpu.memory_space<vmem>>, %arg4: memref<256x128xbf16, #tpu.memory_space<vmem>>, %arg5: memref<1x128xf32, #tpu.memory_space<vmem>>, %arg6: memref<8x128xbf16, #tpu.memory_space<vmem>>, %arg7: memref<8x128xf32, #tpu.memory_space<vmem>>) attributes {dimension_semantics = [#tpu.dimension_semantics<parallel>, #tpu.dimension_semantics<parallel>, #tpu.dimension_semantics<arbitrary>], iteration_bounds = array<i64: 1, 1, 1>, scalar_prefetch = 0 : i64, scratch_operands = 1 : i64, tpu.core_type = #tpu.core_type<tc>, window_params = [{transform_indices = @transform_0, window_bounds = array<i64: 8, 256>}, {transform_indices = @transform_1, window_bounds = array<i64: 256, 128>}, {transform_indices = @transform_2, window_bounds = array<i64: 1, 128>}, {transform_indices = @transform_3, window_bounds = array<i64: 8, 128>}]} {
    %c0_i32 = arith.constant 0 : i32
    %0 = arith.cmpi eq, %arg2, %c0_i32 : i32
    %1 = arith.extui %0 : i1 to i32
    %c0_i32_0 = arith.constant 0 : i32
    %2 = arith.cmpi ne, %1, %c0_i32_0 : i32
    scf.if %2 {
      %cst_10 = arith.constant 0.000000e+00 : f32
      %12 = vector.broadcast %cst_10 : f32 to vector<8x128xf32>
      %c0_11 = arith.constant 0 : index
      %c0_12 = arith.constant 0 : index
      %13 = vector.load %arg7[%c0_11, %c0_12] : memref<8x128xf32, #tpu.memory_space<vmem>>, vector<8x128xf32>
      tpu.vector_store %arg7[%c0_11, %c0_12], %12 {strides = array<i32>} : memref<8x128xf32, #tpu.memory_space<vmem>>, vector<8x128xf32>,
    } else {
    }
    %c0 = arith.constant 0 : index
    %c0_1 = arith.constant 0 : index
    %3 = vector.load %arg7[%c0, %c0_1] : memref<8x128xf32, #tpu.memory_space<vmem>>, vector<8x128xf32>
    %c0_2 = arith.constant 0 : index
    %c0_3 = arith.constant 0 : index
    %4 = vector.load %arg3[%c0_2, %c0_3] : memref<8x256xbf16, #tpu.memory_space<vmem>>, vector<8x256xbf16>
    %c0_4 = arith.constant 0 : index
    %c0_5 = arith.constant 0 : index
    %5 = vector.load %arg4[%c0_4, %c0_5] : memref<256x128xbf16, #tpu.memory_space<vmem>>, vector<256x128xbf16>
    %cst = arith.constant dense<0.000000e+00> : vector<8x128xf32>
    %6 = tpu.matmul %4, %5, %cst {dimension_numbers = #tpu.dot_dimension_numbers<[1], [0], [0], [1], [0, 0, 1, 1], [], []>} : vector<8x256xbf16>, vector<256x128xbf16>, vector<8x128xf32> -> vector<8x128xf32>
    %7 = arith.addf %3, %6 : vector<8x128xf32>
    %c0_6 = arith.constant 0 : index
    %c0_7 = arith.constant 0 : index
    %8 = vector.load %arg7[%c0_6, %c0_7] : memref<8x128xf32, #tpu.memory_space<vmem>>, vector<8x128xf32>
    tpu.vector_store %arg7[%c0_6, %c0_7], %7 {strides = array<i32>} : memref<8x128xf32, #tpu.memory_space<vmem>>, vector<8x128xf32>,
    %c0_i32_8 = arith.constant 0 : i32
    %9 = arith.cmpi eq, %arg2, %c0_i32_8 : i32
    %10 = arith.extui %9 : i1 to i32
    %c0_i32_9 = arith.constant 0 : i32
    %11 = arith.cmpi ne, %10, %c0_i32_9 : i32
    scf.if %11 {
      %c0_10 = arith.constant 0 : index
      %c0_11 = arith.constant 0 : index
      %12 = vector.load %arg7[%c0_10, %c0_11] : memref<8x128xf32, #tpu.memory_space<vmem>>, vector<8x128xf32>
      %c0_12 = arith.constant 0 : index
      %c0_13 = arith.constant 0 : index
      %13 = vector.load %arg5[%c0_12, %c0_13] : memref<1x128xf32, #tpu.memory_space<vmem>>, vector<1x128xf32>
      %14 = vector.broadcast %13 : vector<1x128xf32> to vector<8x128xf32>
      %15 = arith.addf %12, %14 : vector<8x128xf32>
      %cst_14 = arith.constant 0.00999999977 : f32
      %16 = vector.broadcast %cst_14 : f32 to vector<8x128xf32>
      %17 = arith.mulf %16, %15 : vector<8x128xf32>
      %18 = arith.maximumf %15, %17 : vector<8x128xf32>
      %19 = arith.truncf %18 : vector<8x128xf32> to vector<8x128xbf16>
      %c0_15 = arith.constant 0 : index
      %c0_16 = arith.constant 0 : index
      %20 = vector.load %arg6[%c0_15, %c0_16] : memref<8x128xbf16, #tpu.memory_space<vmem>>, vector<8x128xbf16>
      tpu.vector_store %arg6[%c0_15, %c0_16], %19 {strides = array<i32>} : memref<8x128xbf16, #tpu.memory_space<vmem>>, vector<8x128xbf16>,
    } else {
    }
    return
  }
  func.func @transform_0(%arg0: i32, %arg1: i32, %arg2: i32) -> (i32, i32) {
    %c0_i32 = arith.constant 0 : i32
    return %arg0, %arg2 : i32, i32
  }
  func.func @transform_1(%arg0: i32, %arg1: i32, %arg2: i32) -> (i32, i32) {
    %c0_i32 = arith.constant 0 : i32
    return %arg2, %arg1 : i32, i32
  }
  func.func @transform_2(%arg0: i32, %arg1: i32, %arg2: i32) -> (i32, i32) {
    %c0_i32 = arith.constant 0 : i32
    %c0_i32_0 = arith.constant 0 : i32
    return %c0_i32, %arg1 : i32, i32
  }
  func.func @transform_3(%arg0: i32, %arg1: i32, %arg2: i32) -> (i32, i32) {
    %c0_i32 = arith.constant 0 : i32
    return %arg0, %arg1 : i32, i32
  }
}

module attributes {stable_mosaic.version = 11 : i64} {
  func.func @_mm_bias_act_kernel(%arg0: i32, %arg1: i32, %arg2: i32, %arg3: memref<2x256xbf16, #tpu.memory_space<vmem>>, %arg4: memref<256x128xbf16, #tpu.memory_space<vmem>>, %arg5: memref<1x128xf32, #tpu.memory_space<vmem>>, %arg6: memref<2x128xf32, #tpu.memory_space<vmem>>, %arg7: memref<2x128xf32, #tpu.memory_space<vmem>>) attributes {dimension_semantics = [#tpu.dimension_semantics<parallel>, #tpu.dimension_semantics<parallel>, #tpu.dimension_semantics<arbitrary>], iteration_bounds = array<i64: 1, 1, 2>, scalar_prefetch = 0 : i64, scratch_operands = 1 : i64, tpu.core_type = #tpu.core_type<tc>, window_params = [{transform_indices = @transform_0, window_bounds = array<i64: 2, 256>}, {transform_indices = @transform_1, window_bounds = array<i64: 256, 128>}, {transform_indices = @transform_2, window_bounds = array<i64: 1, 128>}, {transform_indices = @transform_3, window_bounds = array<i64: 2, 128>}]} {
    %c0_i32 = arith.constant 0 : i32
    %0 = arith.cmpi eq, %arg2, %c0_i32 : i32
    %1 = arith.extui %0 : i1 to i32
    %c0_i32_0 = arith.constant 0 : i32
    %2 = arith.cmpi ne, %1, %c0_i32_0 : i32
    scf.if %2 {
      %cst_9 = arith.constant 0.000000e+00 : f32
      %12 = vector.broadcast %cst_9 : f32 to vector<2x128xf32>
      %c0_10 = arith.constant 0 : index
      %c0_11 = arith.constant 0 : index
      %13 = vector.load %arg7[%c0_10, %c0_11] : memref<2x128xf32, #tpu.memory_space<vmem>>, vector<2x128xf32>
      tpu.vector_store %arg7[%c0_10, %c0_11], %12 {strides = array<i32>} : memref<2x128xf32, #tpu.memory_space<vmem>>, vector<2x128xf32>,
    } else {
    }
    %c0 = arith.constant 0 : index
    %c0_1 = arith.constant 0 : index
    %3 = vector.load %arg7[%c0, %c0_1] : memref<2x128xf32, #tpu.memory_space<vmem>>, vector<2x128xf32>
    %c0_2 = arith.constant 0 : index
    %c0_3 = arith.constant 0 : index
    %4 = vector.load %arg3[%c0_2, %c0_3] : memref<2x256xbf16, #tpu.memory_space<vmem>>, vector<2x256xbf16>
    %c0_4 = arith.constant 0 : index
    %c0_5 = arith.constant 0 : index
    %5 = vector.load %arg4[%c0_4, %c0_5] : memref<256x128xbf16, #tpu.memory_space<vmem>>, vector<256x128xbf16>
    %cst = arith.constant dense<0.000000e+00> : vector<2x128xf32>
    %6 = tpu.matmul %4, %5, %cst {dimension_numbers = #tpu.dot_dimension_numbers<[1], [0], [0], [1], [0, 0, 1, 1], [], []>} : vector<2x256xbf16>, vector<256x128xbf16>, vector<2x128xf32> -> vector<2x128xf32>
    %7 = arith.addf %3, %6 : vector<2x128xf32>
    %c0_6 = arith.constant 0 : index
    %c0_7 = arith.constant 0 : index
    %8 = vector.load %arg7[%c0_6, %c0_7] : memref<2x128xf32, #tpu.memory_space<vmem>>, vector<2x128xf32>
    tpu.vector_store %arg7[%c0_6, %c0_7], %7 {strides = array<i32>} : memref<2x128xf32, #tpu.memory_space<vmem>>, vector<2x128xf32>,
    %c1_i32 = arith.constant 1 : i32
    %9 = arith.cmpi eq, %arg2, %c1_i32 : i32
    %10 = arith.extui %9 : i1 to i32
    %c0_i32_8 = arith.constant 0 : i32
    %11 = arith.cmpi ne, %10, %c0_i32_8 : i32
    scf.if %11 {
      %c0_9 = arith.constant 0 : index
      %c0_10 = arith.constant 0 : index
      %12 = vector.load %arg7[%c0_9, %c0_10] : memref<2x128xf32, #tpu.memory_space<vmem>>, vector<2x128xf32>
      %c0_11 = arith.constant 0 : index
      %c0_12 = arith.constant 0 : index
      %13 = vector.load %arg5[%c0_11, %c0_12] : memref<1x128xf32, #tpu.memory_space<vmem>>, vector<1x128xf32>
      %14 = vector.broadcast %13 : vector<1x128xf32> to vector<2x128xf32>
      %15 = arith.addf %12, %14 : vector<2x128xf32>
      %16 = arith.negf %15 : vector<2x128xf32>
      %17 = math.exp %16 : vector<2x128xf32>
      %cst_13 = arith.constant 1.000000e+00 : f32
      %18 = vector.broadcast %cst_13 : f32 to vector<2x128xf32>
      %19 = arith.addf %18, %17 : vector<2x128xf32>
      %20 = arith.divf %18, %19 : vector<2x128xf32>
      %c0_14 = arith.constant 0 : index
      %c0_15 = arith.constant 0 : index
      %21 = vector.load %arg6[%c0_14, %c0_15] : memref<2x128xf32, #tpu.memory_space<vmem>>, vector<2x128xf32>
      tpu.vector_store %arg6[%c0_14, %c0_15], %20 {strides = array<i32>} : memref<2x128xf32, #tpu.memory_space<vmem>>, vector<2x128xf32>,
    } else {
    }
    return
  }
  func.func @transform_0(%arg0: i32, %arg1: i32, %arg2: i32) -> (i32, i32) {
    %c0_i32 = arith.constant 0 : i32
    return %arg0, %arg2 : i32, i32
  }
  func.func @transform_1(%arg0: i32, %arg1: i32, %arg2: i32) -> (i32, i32) {
    %c0_i32 = arith.constant 0 : i32
    return %arg2, %arg1 : i32, i32
  }
  func.func @transform_2(%arg0: i32, %arg1: i32, %arg2: i32) -> (i32, i32) {
    %c0_i32 = arith.constant 0 : i32
    %c0_i32_0 = arith.constant 0 : i32
    return %c0_i32, %arg1 : i32, i32
  }
  func.func @transform_3(%arg0: i32, %arg1: i32, %arg2: i32) -> (i32, i32) {
    %c0_i32 = arith.constant 0 : i32
    return %arg0, %arg1 : i32, i32
  }
}

</mosaic_0001>

<llo_original>
// kernel: discriminator_forward.4
$region0: #{discriminator_forward.4}
  #allocation0 [shape = 'u32[]', space=smem, size = 0x4, offset = 0x4, fixed_abs, tag = 'smem constant byte address 0x4 - core index']
  #allocation1 [shape = 'u32[144,128]{1,0:T(1,128)}', space=vmem, size = 0x12000, scoped, tag = 'internal scratch']
  #allocation2 [shape = 'f32[128,128]{1,0:T(8,128)}', space=vmem, size = 0x10000, scoped, tag = 'scratch operand']
  %s0 = inlined_call_operand.vmem [shape: bf16[128,128], index: 0, kind: input, shape index: {}]
  %s1 = inlined_call_operand.vmem [shape: bf16[128,128], index: 1, kind: input, shape index: {}]
  %s2 = inlined_call_operand.vmem [shape: f32[1,128], index: 2, kind: input, shape index: {}]
  %s3 = inlined_call_operand.vmem [shape: bf16[128,128], index: 3, kind: output, shape index: {}]
  %s4 = sld [smem:[#allocation0]]
  $region30: #{discriminator_forward.4} parent=0
    _
  %s6 = ssub.s32 1, %s4
  %s7 = scalar_select 0, %s6, %s4
  // Predicated region
  $region2: #{discriminator_forward.4} parent=0 // pred_check
    _
  $region3: #{discriminator_forward.4} parent=0 // pred_check_branch
    %9 = sbr.rel (0) target = $region5
  $region4: #{discriminator_forward.4} parent=0 // pred_region
    _
  $region5: #{discriminator_forward.4} parent=0 // pred_fallthru
    _
  // Predicated region
  $region6: #{discriminator_forward.4} parent=0 // pred_check
    _
  $region7: #{discriminator_forward.4} parent=0 // pred_check_branch
    %11 = sbr.rel (0) target = $region9
  $region8: #{discriminator_forward.4} parent=0 // pred_region
    _
  $region9: #{discriminator_forward.4} parent=0 // pred_fallthru
    _
  // Predicated region
  $region10: #{discriminator_forward.4} parent=0 // pred_check
    _
  $region11: #{discriminator_forward.4} parent=0 // pred_check_branch
    %13 = sbr.rel (0) target = $region13
  $region12: #{discriminator_forward.4} parent=0 // pred_region
    _
  $region13: #{discriminator_forward.4} parent=0 // pred_fallthru
    _
  %p15 = scmp.eq.s32.totalorder 0, 0
  // Predicated region
  $region14: #{discriminator_forward.4} parent=0 // pred_check
    %p16 = pneg %p15
  $region15: #{discriminator_forward.4} parent=0 // pred_check_branch
    %18 = sbr.rel (%p16) target = $region17
  $region16: #{discriminator_forward.4} parent=0 // pred_region
    %19 = vst [vmem:[#allocation2] sm:$0xff] 0.0
    %20 = vst [vmem:[#allocation2 + $0x8] sm:$0xff] 0.0
    %21 = vst [vmem:[#allocation2 + $0x10] sm:$0xff] 0.0
    %22 = vst [vmem:[#allocation2 + $0x18] sm:$0xff] 0.0
    %23 = vst [vmem:[#allocation2 + $0x20] sm:$0xff] 0.0
    %24 = vst [vmem:[#allocation2 + $0x28] sm:$0xff] 0.0
    %25 = vst [vmem:[#allocation2 + $0x30] sm:$0xff] 0.0
    %26 = vst [vmem:[#allocation2 + $0x38] sm:$0xff] 0.0
    %27 = vst [vmem:[#allocation2 + $0x40] sm:$0xff] 0.0
    %28 = vst [vmem:[#allocation2 + $0x48] sm:$0xff] 0.0
    %29 = vst [vmem:[#allocation2 + $0x50] sm:$0xff] 0.0
    %30 = vst [vmem:[#allocation2 + $0x58] sm:$0xff] 0.0
    %31 = vst [vmem:[#allocation2 + $0x60] sm:$0xff] 0.0
    %32 = vst [vmem:[#allocation2 + $0x68] sm:$0xff] 0.0
    %33 = vst [vmem:[#allocation2 + $0x70] sm:$0xff] 0.0
    %34 = vst [vmem:[#allocation2 + $0x78] sm:$0xff] 0.0
  $region17: #{discriminator_forward.4} parent=0 // pred_fallthru
    _
  %v35 = vld [vmem:[#allocation2] sm:$0xff]
  %v36 = vld [vmem:[#allocation2 + $0x8] sm:$0xff]
  %v37 = vld [vmem:[#allocation2 + $0x10] sm:$0xff]
  %v38 = vld [vmem:[#allocation2 + $0x18] sm:$0xff]
  %v39 = vld [vmem:[#allocation2 + $0x20] sm:$0xff]
  %v40 = vld [vmem:[#allocation2 + $0x28] sm:$0xff]
  %v41 = vld [vmem:[#allocation2 + $0x30] sm:$0xff]
  %v42 = vld [vmem:[#allocation2 + $0x38] sm:$0xff]
  %v43 = vld [vmem:[#allocation2 + $0x40] sm:$0xff]
  %v44 = vld [vmem:[#allocation2 + $0x48] sm:$0xff]
  %v45 = vld [vmem:[#allocation2 + $0x50] sm:$0xff]
  %v46 = vld [vmem:[#allocation2 + $0x58] sm:$0xff]
  %v47 = vld [vmem:[#allocation2 + $0x60] sm:$0xff]
  %v48 = vld [vmem:[#allocation2 + $0x68] sm:$0xff]
  %v49 = vld [vmem:[#allocation2 + $0x70] sm:$0xff]
  %v50 = vld [vmem:[#allocation2 + $0x78] sm:$0xff]
  %v51 = vld [vmem:[%s0] sm:$0xf]
  %v52 = vld [vmem:[%s0 + $0x4] sm:$0xf]
  %v53 = vld [vmem:[%s0 + $0x8] sm:$0xf]
  %v54 = vld [vmem:[%s0 + $0xc] sm:$0xf]
  %v55 = vld [vmem:[%s0 + $0x10] sm:$0xf]
  %v56 = vld [vmem:[%s0 + $0x14] sm:$0xf]
  %v57 = vld [vmem:[%s0 + $0x18] sm:$0xf]
  %v58 = vld [vmem:[%s0 + $0x1c] sm:$0xf]
  %v59 = vld [vmem:[%s0 + $0x20] sm:$0xf]
  %v60 = vld [vmem:[%s0 + $0x24] sm:$0xf]
  %v61 = vld [vmem:[%s0 + $0x28] sm:$0xf]
  %v62 = vld [vmem:[%s0 + $0x2c] sm:$0xf]
  %v63 = vld [vmem:[%s0 + $0x30] sm:$0xf]
  %v64 = vld [vmem:[%s0 + $0x34] sm:$0xf]
  %v65 = vld [vmem:[%s0 + $0x38] sm:$0xf]
  %v66 = vld [vmem:[%s0 + $0x3c] sm:$0xf]
  %v67 = vld [vmem:[%s1] sm:$0xf]
  %v68 = vld [vmem:[%s1 + $0x4] sm:$0xf]
  %v69 = vld [vmem:[%s1 + $0x8] sm:$0xf]
  %v70 = vld [vmem:[%s1 + $0xc] sm:$0xf]
  %v71 = vld [vmem:[%s1 + $0x10] sm:$0xf]
  %v72 = vld [vmem:[%s1 + $0x14] sm:$0xf]
  %v73 = vld [vmem:[%s1 + $0x18] sm:$0xf]
  %v74 = vld [vmem:[%s1 + $0x1c] sm:$0xf]
  %v75 = vld [vmem:[%s1 + $0x20] sm:$0xf]
  %v76 = vld [vmem:[%s1 + $0x24] sm:$0xf]
  %v77 = vld [vmem:[%s1 + $0x28] sm:$0xf]
  %v78 = vld [vmem:[%s1 + $0x2c] sm:$0xf]
  %v79 = vld [vmem:[%s1 + $0x30] sm:$0xf]
  %v80 = vld [vmem:[%s1 + $0x34] sm:$0xf]
  %v81 = vld [vmem:[%s1 + $0x38] sm:$0xf]
  %v82 = vld [vmem:[%s1 + $0x3c] sm:$0xf]
  %v99 = vunpack.c.l.b16 %v51
  %v100 = vunpack.c.l.b16 %v52
  %v101 = vunpack.c.l.b16 %v53
  %v102 = vunpack.c.l.b16 %v54
  %v103 = vunpack.c.l.b16 %v55
  %v104 = vunpack.c.l.b16 %v56
  %v105 = vunpack.c.l.b16 %v57
  %v106 = vunpack.c.l.b16 %v58
  %v107 = vunpack.c.l.b16 %v59
  %v108 = vunpack.c.l.b16 %v60
  %v109 = vunpack.c.l.b16 %v61
  %v110 = vunpack.c.l.b16 %v62
  %v111 = vunpack.c.l.b16 %v63
  %v112 = vunpack.c.l.b16 %v64
  %v113 = vunpack.c.l.b16 %v65
  %v114 = vunpack.c.l.b16 %v66
  %v115 = vpack.c.b16 %v100, %v99
  %v116 = vpack.c.b16 %v102, %v101
  %v117 = vpack.c.b16 %v104, %v103
  %v118 = vpack.c.b16 %v106, %v105
  %v119 = vpack.c.b16 %v108, %v107
  %v120 = vpack.c.b16 %v110, %v109
  %v121 = vpack.c.b16 %v112, %v111
  %v122 = vpack.c.b16 %v114, %v113
  %v147 = vunpack.c.l.b16 %v67
  %v148 = vunpack.c.l.b16 %v68
  %v149 = vunpack.c.l.b16 %v69
  %v150 = vunpack.c.l.b16 %v70
  %v151 = vunpack.c.l.b16 %v71
  %v152 = vunpack.c.l.b16 %v72
  %v153 = vunpack.c.l.b16 %v73
  %v154 = vunpack.c.l.b16 %v74
  %v155 = vunpack.c.l.b16 %v75
  %v156 = vunpack.c.l.b16 %v76
  %v157 = vunpack.c.l.b16 %v77
  %v158 = vunpack.c.l.b16 %v78
  %v159 = vunpack.c.l.b16 %v79
  %v160 = vunpack.c.l.b16 %v80
  %v161 = vunpack.c.l.b16 %v81
  %v162 = vunpack.c.l.b16 %v82
  %v163 = vpack.c.b16 %v148, %v147
  %v164 = vpack.c.b16 %v150, %v149
  %v165 = vpack.c.b16 %v152, %v151
  %v166 = vpack.c.b16 %v154, %v153
  %v167 = vpack.c.b16 %v156, %v155
  %v168 = vpack.c.b16 %v158, %v157
  %v169 = vpack.c.b16 %v160, %v159
  %v170 = vpack.c.b16 %v162, %v161
  %179 = vmatprep.subr.bf16.mxu0 0
  %180 = vmatpush1.bf16.msra.mxu0 %v163
  %181 = vmatprep.subr.bf16.mxu0 0
  %182 = vmatpush1.bf16.msra.mxu0 %v164
  %183 = vmatprep.subr.bf16.mxu0 0
  %184 = vmatpush1.bf16.msra.mxu0 %v165
  %185 = vmatprep.subr.bf16.mxu0 0
  %186 = vmatpush1.bf16.msra.mxu0 %v166
  %187 = vmatprep.subr.bf16.mxu0 0
  %188 = vmatpush1.bf16.msra.mxu0 %v167
  %189 = vmatprep.subr.bf16.mxu0 0
  %190 = vmatpush1.bf16.msra.mxu0 %v168
  %191 = vmatprep.subr.bf16.mxu0 0
  %192 = vmatpush1.bf16.msra.mxu0 %v169
  %193 = vmatprep.subr.bf16.mxu0 0
  %194 = vmatpush1.bf16.msra.mxu0 %v170
  %195 = vmatprep.subr.bf16.mxu0 0
  %196 = vmatpush1.bf16.msra.mxu0 0
  %197 = vmatprep.subr.bf16.mxu0 0
  %198 = vmatpush1.bf16.msra.mxu0 0
  %199 = vmatprep.subr.bf16.mxu0 0
  %200 = vmatpush1.bf16.msra.mxu0 0
  %201 = vmatprep.subr.bf16.mxu0 0
  %202 = vmatpush1.bf16.msra.mxu0 0
  %203 = vmatprep.subr.bf16.mxu0 0
  %204 = vmatpush1.bf16.msra.mxu0 0
  %205 = vmatprep.subr.bf16.mxu0 0
  %206 = vmatpush1.bf16.msra.mxu0 0
  %207 = vmatprep.subr.bf16.mxu0 0
  %208 = vmatpush1.bf16.msra.mxu0 0
  %209 = vmatprep.subr.bf16.mxu0 0
  %210 = vmatpush1.bf16.msra.mxu0 0
  %211 = vmatprep.mubr.bf16.mxu0 0
  %212 = vmatmul.mubr.bf16.gmra.mrb[0].mxu0 %v115
  %v213 = vpop.f32.mrb[0].mxu0
  %v214 = vadd.f32 0.0, %v213
  %v215 = vpop.f32.mrb[0].mxu0
  %v216 = vpop.f32.mrb[0].mxu0
  %v217 = vadd.f32 0.0, %v216
  %v218 = vpop.f32.mrb[0].mxu0
  %219 = vmatprep.mubr.bf16.mxu0 0
  %220 = vmatmul.mubr.bf16.gmra.mrb[0].mxu0 %v116
  %v221 = vpop.f32.mrb[0].mxu0
  %v222 = vadd.f32 0.0, %v221
  %v223 = vpop.f32.mrb[0].mxu0
  %v224 = vpop.f32.mrb[0].mxu0
  %v225 = vadd.f32 0.0, %v224
  %v226 = vpop.f32.mrb[0].mxu0
  %227 = vmatprep.mubr.bf16.mxu0 0
  %228 = vmatmul.mubr.bf16.gmra.mrb[0].mxu0 %v117
  %v229 = vpop.f32.mrb[0].mxu0
  %v230 = vadd.f32 0.0, %v229
  %v231 = vpop.f32.mrb[0].mxu0
  %v232 = vpop.f32.mrb[0].mxu0
  %v233 = vadd.f32 0.0, %v232
  %v234 = vpop.f32.mrb[0].mxu0
  %235 = vmatprep.mubr.bf16.mxu0 0
  %236 = vmatmul.mubr.bf16.gmra.mrb[0].mxu0 %v118
  %v237 = vpop.f32.mrb[0].mxu0
  %v238 = vadd.f32 0.0, %v237
  %v239 = vpop.f32.mrb[0].mxu0
  %v240 = vpop.f32.mrb[0].mxu0
  %v241 = vadd.f32 0.0, %v240
  %v242 = vpop.f32.mrb[0].mxu0
  %243 = vmatprep.mubr.bf16.mxu0 0
  %244 = vmatmul.mubr.bf16.gmra.mrb[0].mxu0 %v119
  %v245 = vpop.f32.mrb[0].mxu0
  %v246 = vadd.f32 0.0, %v245
  %v247 = vpop.f32.mrb[0].mxu0
  %v248 = vpop.f32.mrb[0].mxu0
  %v249 = vadd.f32 0.0, %v248
  %v250 = vpop.f32.mrb[0].mxu0
  %251 = vmatprep.mubr.bf16.mxu0 0
  %252 = vmatmul.mubr.bf16.gmra.mrb[0].mxu0 %v120
  %v253 = vpop.f32.mrb[0].mxu0
  %v254 = vadd.f32 0.0, %v253
  %v255 = vpop.f32.mrb[0].mxu0
  %v256 = vpop.f32.mrb[0].mxu0
  %v257 = vadd.f32 0.0, %v256
  %v258 = vpop.f32.mrb[0].mxu0
  %259 = vmatprep.mubr.bf16.mxu0 0
  %260 = vmatmul.mubr.bf16.gmra.mrb[0].mxu0 %v121
  %v261 = vpop.f32.mrb[0].mxu0
  %v262 = vadd.f32 0.0, %v261
  %v263 = vpop.f32.mrb[0].mxu0
  %v264 = vpop.f32.mrb[0].mxu0
  %v265 = vadd.f32 0.0, %v264
  %v266 = vpop.f32.mrb[0].mxu0
  %267 = vmatprep.mubr.bf16.mxu0 0
  %268 = vmatmul.mubr.bf16.gmra.mrb[0].mxu0 %v122
  %v269 = vpop.f32.mrb[0].mxu0
  %v270 = vadd.f32 0.0, %v269
  %v271 = vpop.f32.mrb[0].mxu0
  %v272 = vpop.f32.mrb[0].mxu0
  %v273 = vadd.f32 0.0, %v272
  %v274 = vpop.f32.mrb[0].mxu0
  %275 = vdwg.mxu0
  %v276 = vadd.f32 %v35, %v214
  %v277 = vadd.f32 %v36, %v217
  %v278 = vadd.f32 %v37, %v222
  %v279 = vadd.f32 %v38, %v225
  %v280 = vadd.f32 %v39, %v230
  %v281 = vadd.f32 %v40, %v233
  %v282 = vadd.f32 %v41, %v238
  %v283 = vadd.f32 %v42, %v241
  %v284 = vadd.f32 %v43, %v246
  %v285 = vadd.f32 %v44, %v249
  %v286 = vadd.f32 %v45, %v254
  %v287 = vadd.f32 %v46, %v257
  %v288 = vadd.f32 %v47, %v262
  %v289 = vadd.f32 %v48, %v265
  %v290 = vadd.f32 %v49, %v270
  %v291 = vadd.f32 %v50, %v273
  %292 = vst [vmem:[#allocation2] sm:$0xff] %v276
  %293 = vst [vmem:[#allocation2 + $0x8] sm:$0xff] %v277
  %294 = vst [vmem:[#allocation2 + $0x10] sm:$0xff] %v278
  %295 = vst [vmem:[#allocation2 + $0x18] sm:$0xff] %v279
  %296 = vst [vmem:[#allocation2 + $0x20] sm:$0xff] %v280
  %297 = vst [vmem:[#allocation2 + $0x28] sm:$0xff] %v281
  %298 = vst [vmem:[#allocation2 + $0x30] sm:$0xff] %v282
  %299 = vst [vmem:[#allocation2 + $0x38] sm:$0xff] %v283
  %300 = vst [vmem:[#allocation2 + $0x40] sm:$0xff] %v284
  %301 = vst [vmem:[#allocation2 + $0x48] sm:$0xff] %v285
  %302 = vst [vmem:[#allocation2 + $0x50] sm:$0xff] %v286
  %303 = vst [vmem:[#allocation2 + $0x58] sm:$0xff] %v287
  %304 = vst [vmem:[#allocation2 + $0x60] sm:$0xff] %v288
  %305 = vst [vmem:[#allocation2 + $0x68] sm:$0xff] %v289
  %306 = vst [vmem:[#allocation2 + $0x70] sm:$0xff] %v290
  %307 = vst [vmem:[#allocation2 + $0x78] sm:$0xff] %v291
  // Predicated region
  $region18: #{discriminator_forward.4} parent=0 // pred_check
    %p308 = pneg %p15
  $region19: #{discriminator_forward.4} parent=0 // pred_check_branch
    %310 = sbr.rel (%p308) target = $region21
  $region20: #{discriminator_forward.4} parent=0 // pred_region
    %v311 = vld [vmem:[#allocation2] sm:$0xff]
    %v312 = vld [vmem:[#allocation2 + $0x8] sm:$0xff]
    %v313 = vld [vmem:[#allocation2 + $0x10] sm:$0xff]
    %v314 = vld [vmem:[#allocation2 + $0x18] sm:$0xff]
    %v315 = vld [vmem:[#allocation2 + $0x20] sm:$0xff]
    %v316 = vld [vmem:[#allocation2 + $0x28] sm:$0xff]
    %v317 = vld [vmem:[#allocation2 + $0x30] sm:$0xff]
    %v318 = vld [vmem:[#allocation2 + $0x38] sm:$0xff]
    %v319 = vld [vmem:[#allocation2 + $0x40] sm:$0xff]
    %v320 = vld [vmem:[#allocation2 + $0x48] sm:$0xff]
    %v321 = vld [vmem:[#allocation2 + $0x50] sm:$0xff]
    %v322 = vld [vmem:[#allocation2 + $0x58] sm:$0xff]
    %v323 = vld [vmem:[#allocation2 + $0x60] sm:$0xff]
    %v324 = vld [vmem:[#allocation2 + $0x68] sm:$0xff]
    %v325 = vld [vmem:[#allocation2 + $0x70] sm:$0xff]
    %v326 = vld [vmem:[#allocation2 + $0x78] sm:$0xff]
    %v327 = vld [vmem:[%s2] sm:$0x1]
    %v329 = vlaneseq
    %v330 = vshrl.u32 %v329, 7
    %v331 = vsub.s32 0, %v330
    %v332 = vrot.slane %v327, %v331
    %v334 = vadd.f32 %v311, %v332
    %v335 = vadd.f32 %v312, %v332
    %v336 = vadd.f32 %v313, %v332
    %v337 = vadd.f32 %v314, %v332
    %v338 = vadd.f32 %v315, %v332
    %v339 = vadd.f32 %v316, %v332
    %v340 = vadd.f32 %v317, %v332
    %v341 = vadd.f32 %v318, %v332
    %v342 = vadd.f32 %v319, %v332
    %v343 = vadd.f32 %v320, %v332
    %v344 = vadd.f32 %v321, %v332
    %v345 = vadd.f32 %v322, %v332
    %v346 = vadd.f32 %v323, %v332
    %v347 = vadd.f32 %v324, %v332
    %v348 = vadd.f32 %v325, %v332
    %v349 = vadd.f32 %v326, %v332
    %v350 = vmul.f32 %v334, 0.01
    %v351 = vmul.f32 %v335, 0.01
    %v352 = vmul.f32 %v336, 0.01
    %v353 = vmul.f32 %v337, 0.01
    %v354 = vmul.f32 %v338, 0.01
    %v355 = vmul.f32 %v339, 0.01
    %v356 = vmul.f32 %v340, 0.01
    %v357 = vmul.f32 %v341, 0.01
    %v358 = vmul.f32 %v342, 0.01
    %v359 = vmul.f32 %v343, 0.01
    %v360 = vmul.f32 %v344, 0.01
    %v361 = vmul.f32 %v345, 0.01
    %v362 = vmul.f32 %v346, 0.01
    %v363 = vmul.f32 %v347, 0.01
    %v364 = vmul.f32 %v348, 0.01
    %v365 = vmul.f32 %v349, 0.01
    %v366 = vmax.f32 %v334, %v350
    %v367 = vmax.f32 %v335, %v351
    %v368 = vmax.f32 %v336, %v352
    %v369 = vmax.f32 %v337, %v353
    %v370 = vmax.f32 %v338, %v354
    %v371 = vmax.f32 %v339, %v355
    %v372 = vmax.f32 %v340, %v356
    %v373 = vmax.f32 %v341, %v357
    %v374 = vmax.f32 %v342, %v358
    %v375 = vmax.f32 %v343, %v359
    %v376 = vmax.f32 %v344, %v360
    %v377 = vmax.f32 %v345, %v361
    %v378 = vmax.f32 %v346, %v362
    %v379 = vmax.f32 %v347, %v363
    %v380 = vmax.f32 %v348, %v364
    %v381 = vmax.f32 %v349, %v365
    %v382 = vpack.c.bf16 %v367, %v366
    %v383 = vpack.c.bf16 %v369, %v368
    %v384 = vpack.c.bf16 %v371, %v370
    %v385 = vpack.c.bf16 %v373, %v372
    %v386 = vpack.c.bf16 %v375, %v374
    %v387 = vpack.c.bf16 %v377, %v376
    %v388 = vpack.c.bf16 %v379, %v378
    %v389 = vpack.c.bf16 %v381, %v380
    %v398 = vunpack.c.l.b16 %v382
    %v399 = vunpack.c.h.b16 %v382
    %v400 = vunpack.c.l.b16 %v383
    %v401 = vunpack.c.h.b16 %v383
    %v402 = vunpack.c.l.b16 %v384
    %v403 = vunpack.c.h.b16 %v384
    %v404 = vunpack.c.l.b16 %v385
    %v405 = vunpack.c.h.b16 %v385
    %v406 = vunpack.c.l.b16 %v386
    %v407 = vunpack.c.h.b16 %v386
    %v408 = vunpack.c.l.b16 %v387
    %v409 = vunpack.c.h.b16 %v387
    %v410 = vunpack.c.l.b16 %v388
    %v411 = vunpack.c.h.b16 %v388
    %v412 = vunpack.c.l.b16 %v389
    %v413 = vunpack.c.h.b16 %v389
    %v414 = vpack.c.b16 %v398, %v398
    %v415 = vpack.c.b16 %v399, %v399
    %v416 = vpack.c.b16 %v400, %v400
    %v417 = vpack.c.b16 %v401, %v401
    %v418 = vpack.c.b16 %v402, %v402
    %v419 = vpack.c.b16 %v403, %v403
    %v420 = vpack.c.b16 %v404, %v404
    %v421 = vpack.c.b16 %v405, %v405
    %v422 = vpack.c.b16 %v406, %v406
    %v423 = vpack.c.b16 %v407, %v407
    %v424 = vpack.c.b16 %v408, %v408
    %v425 = vpack.c.b16 %v409, %v409
    %v426 = vpack.c.b16 %v410, %v410
    %v427 = vpack.c.b16 %v411, %v411
    %v428 = vpack.c.b16 %v412, %v412
    %v429 = vpack.c.b16 %v413, %v413
    %446 = vst [vmem:[%s3] sm:$0xf] %v414
    %447 = vst [vmem:[%s3 + $0x4] sm:$0xf] %v415
    %448 = vst [vmem:[%s3 + $0x8] sm:$0xf] %v416
    %449 = vst [vmem:[%s3 + $0xc] sm:$0xf] %v417
    %450 = vst [vmem:[%s3 + $0x10] sm:$0xf] %v418
    %451 = vst [vmem:[%s3 + $0x14] sm:$0xf] %v419
    %452 = vst [vmem:[%s3 + $0x18] sm:$0xf] %v420
    %453 = vst [vmem:[%s3 + $0x1c] sm:$0xf] %v421
    %454 = vst [vmem:[%s3 + $0x20] sm:$0xf] %v422
    %455 = vst [vmem:[%s3 + $0x24] sm:$0xf] %v423
    %456 = vst [vmem:[%s3 + $0x28] sm:$0xf] %v424
    %457 = vst [vmem:[%s3 + $0x2c] sm:$0xf] %v425
    %458 = vst [vmem:[%s3 + $0x30] sm:$0xf] %v426
    %459 = vst [vmem:[%s3 + $0x34] sm:$0xf] %v427
    %460 = vst [vmem:[%s3 + $0x38] sm:$0xf] %v428
    %461 = vst [vmem:[%s3 + $0x3c] sm:$0xf] %v429
  $region21: #{discriminator_forward.4} parent=0 // pred_fallthru
    _
  // Predicated region
  $region22: #{discriminator_forward.4} parent=0 // pred_check
    _
  $region23: #{discriminator_forward.4} parent=0 // pred_check_branch
    %463 = sbr.rel (0) target = $region25
  $region24: #{discriminator_forward.4} parent=0 // pred_region
    _
  $region25: #{discriminator_forward.4} parent=0 // pred_fallthru
    _
  // Predicated region
  $region26: #{discriminator_forward.4} parent=0 // pred_check
    _
  $region27: #{discriminator_forward.4} parent=0 // pred_check_branch
    %465 = sbr.rel (0) target = $region29
  $region28: #{discriminator_forward.4} parent=0 // pred_region
    _
  $region29: #{discriminator_forward.4} parent=0 // pred_fallthru
    _

// kernel: discriminator_forward.5
$region0: #{discriminator_forward.5}
  #allocation0 [shape = 'u32[]', space=smem, size = 0x4, offset = 0x4, fixed_abs, tag = 'smem constant byte address 0x4 - core index']
  #allocation1 [shape = 'u32[144,128]{1,0:T(1,128)}', space=vmem, size = 0x12000, scoped, tag = 'internal scratch']
  #allocation2 [shape = 'f32[32,128]{1,0:T(8,128)}', space=vmem, size = 0x4000, scoped, tag = 'scratch operand']
  %s0 = inlined_call_operand.vmem [shape: bf16[32,128], index: 0, kind: input, shape index: {}]
  %s1 = inlined_call_operand.vmem [shape: bf16[128,128], index: 1, kind: input, shape index: {}]
  %s2 = inlined_call_operand.vmem [shape: f32[1,128], index: 2, kind: input, shape index: {}]
  %s3 = inlined_call_operand.vmem [shape: f32[1,128], index: 3, kind: input, shape index: {}]
  %s4 = inlined_call_operand.vmem [shape: bf16[32,128], index: 4, kind: output, shape index: {}]
  %s5 = sld [smem:[#allocation0]]
  $region34: #{discriminator_forward.5} parent=0
    _
  %s7 = ssub.s32 1, %s5
  %s8 = scalar_select 0, %s7, %s5
  // Predicated region
  $region2: #{discriminator_forward.5} parent=0 // pred_check
    _
  $region3: #{discriminator_forward.5} parent=0 // pred_check_branch
    %10 = sbr.rel (0) target = $region5
  $region4: #{discriminator_forward.5} parent=0 // pred_region
    _
  $region5: #{discriminator_forward.5} parent=0 // pred_fallthru
    _
  // Predicated region
  $region6: #{discriminator_forward.5} parent=0 // pred_check
    _
  $region7: #{discriminator_forward.5} parent=0 // pred_check_branch
    %12 = sbr.rel (0) target = $region9
  $region8: #{discriminator_forward.5} parent=0 // pred_region
    _
  $region9: #{discriminator_forward.5} parent=0 // pred_fallthru
    _
  // Predicated region
  $region10: #{discriminator_forward.5} parent=0 // pred_check
    _
  $region11: #{discriminator_forward.5} parent=0 // pred_check_branch
    %14 = sbr.rel (0) target = $region13
  $region12: #{discriminator_forward.5} parent=0 // pred_region
    _
  $region13: #{discriminator_forward.5} parent=0 // pred_fallthru
    _
  // Predicated region
  $region14: #{discriminator_forward.5} parent=0 // pred_check
    _
  $region15: #{discriminator_forward.5} parent=0 // pred_check_branch
    %16 = sbr.rel (0) target = $region17
  $region16: #{discriminator_forward.5} parent=0 // pred_region
    _
  $region17: #{discriminator_forward.5} parent=0 // pred_fallthru
    _
  %p18 = scmp.eq.s32.totalorder 0, 0
  // Predicated region
  $region18: #{discriminator_forward.5} parent=0 // pred_check
    %p19 = pneg %p18
  $region19: #{discriminator_forward.5} parent=0 // pred_check_branch
    %21 = sbr.rel (%p19) target = $region21
  $region20: #{discriminator_forward.5} parent=0 // pred_region
    %22 = vst [vmem:[#allocation2] sm:$0xff] 0.0
    %23 = vst [vmem:[#allocation2 + $0x8] sm:$0xff] 0.0
    %24 = vst [vmem:[#allocation2 + $0x10] sm:$0xff] 0.0
    %25 = vst [vmem:[#allocation2 + $0x18] sm:$0xff] 0.0
  $region21: #{discriminator_forward.5} parent=0 // pred_fallthru
    _
  %v26 = vld [vmem:[#allocation2] sm:$0xff]
  %v27 = vld [vmem:[#allocation2 + $0x8] sm:$0xff]
  %v28 = vld [vmem:[#allocation2 + $0x10] sm:$0xff]
  %v29 = vld [vmem:[#allocation2 + $0x18] sm:$0xff]
  %v30 = vld [vmem:[%s0] sm:$0xf]
  %v31 = vld [vmem:[%s0 + $0x4] sm:$0xf]
  %v32 = vld [vmem:[%s0 + $0x8] sm:$0xf]
  %v33 = vld [vmem:[%s0 + $0xc] sm:$0xf]
  %v34 = vld [vmem:[%s1] sm:$0xf]
  %v35 = vld [vmem:[%s1 + $0x4] sm:$0xf]
  %v36 = vld [vmem:[%s1 + $0x8] sm:$0xf]
  %v37 = vld [vmem:[%s1 + $0xc] sm:$0xf]
  %v38 = vld [vmem:[%s1 + $0x10] sm:$0xf]
  %v39 = vld [vmem:[%s1 + $0x14] sm:$0xf]
  %v40 = vld [vmem:[%s1 + $0x18] sm:$0xf]
  %v41 = vld [vmem:[%s1 + $0x1c] sm:$0xf]
  %v42 = vld [vmem:[%s1 + $0x20] sm:$0xf]
  %v43 = vld [vmem:[%s1 + $0x24] sm:$0xf]
  %v44 = vld [vmem:[%s1 + $0x28] sm:$0xf]
  %v45 = vld [vmem:[%s1 + $0x2c] sm:$0xf]
  %v46 = vld [vmem:[%s1 + $0x30] sm:$0xf]
  %v47 = vld [vmem:[%s1 + $0x34] sm:$0xf]
  %v48 = vld [vmem:[%s1 + $0x38] sm:$0xf]
  %v49 = vld [vmem:[%s1 + $0x3c] sm:$0xf]
  %v54 = vunpack.c.l.b16 %v30
  %v55 = vunpack.c.l.b16 %v31
  %v56 = vunpack.c.l.b16 %v32
  %v57 = vunpack.c.l.b16 %v33
  %v58 = vpack.c.b16 %v55, %v54
  %v59 = vpack.c.b16 %v57, %v56
  %v78 = vunpack.c.l.b16 %v34
  %v79 = vunpack.c.l.b16 %v35
  %v80 = vunpack.c.l.b16 %v36
  %v81 = vunpack.c.l.b16 %v37
  %v82 = vunpack.c.l.b16 %v38
  %v83 = vunpack.c.l.b16 %v39
  %v84 = vunpack.c.l.b16 %v40
  %v85 = vunpack.c.l.b16 %v41
  %v86 = vunpack.c.l.b16 %v42
  %v87 = vunpack.c.l.b16 %v43
  %v88 = vunpack.c.l.b16 %v44
  %v89 = vunpack.c.l.b16 %v45
  %v90 = vunpack.c.l.b16 %v46
  %v91 = vunpack.c.l.b16 %v47
  %v92 = vunpack.c.l.b16 %v48
  %v93 = vunpack.c.l.b16 %v49
  %v94 = vpack.c.b16 %v79, %v78
  %v95 = vpack.c.b16 %v81, %v80
  %v96 = vpack.c.b16 %v83, %v82
  %v97 = vpack.c.b16 %v85, %v84
  %v98 = vpack.c.b16 %v87, %v86
  %v99 = vpack.c.b16 %v89, %v88
  %v100 = vpack.c.b16 %v91, %v90
  %v101 = vpack.c.b16 %v93, %v92
  %110 = vmatprep.subr.bf16.mxu0 0
  %111 = vmatpush1.bf16.msra.mxu0 %v94
  %112 = vmatprep.subr.bf16.mxu0 0
  %113 = vmatpush1.bf16.msra.mxu0 %v95
  %114 = vmatprep.subr.bf16.mxu0 0
  %115 = vmatpush1.bf16.msra.mxu0 %v96
  %116 = vmatprep.subr.bf16.mxu0 0
  %117 = vmatpush1.bf16.msra.mxu0 %v97
  %118 = vmatprep.subr.bf16.mxu0 0
  %119 = vmatpush1.bf16.msra.mxu0 %v98
  %120 = vmatprep.subr.bf16.mxu0 0
  %121 = vmatpush1.bf16.msra.mxu0 %v99
  %122 = vmatprep.subr.bf16.mxu0 0
  %123 = vmatpush1.bf16.msra.mxu0 %v100
  %124 = vmatprep.subr.bf16.mxu0 0
  %125 = vmatpush1.bf16.msra.mxu0 %v101
  %126 = vmatprep.subr.bf16.mxu0 0
  %127 = vmatpush1.bf16.msra.mxu0 0
  %128 = vmatprep.subr.bf16.mxu0 0
  %129 = vmatpush1.bf16.msra.mxu0 0
  %130 = vmatprep.subr.bf16.mxu0 0
  %131 = vmatpush1.bf16.msra.mxu0 0
  %132 = vmatprep.subr.bf16.mxu0 0
  %133 = vmatpush1.bf16.msra.mxu0 0
  %134 = vmatprep.subr.bf16.mxu0 0
  %135 = vmatpush1.bf16.msra.mxu0 0
  %136 = vmatprep.subr.bf16.mxu0 0
  %137 = vmatpush1.bf16.msra.mxu0 0
  %138 = vmatprep.subr.bf16.mxu0 0
  %139 = vmatpush1.bf16.msra.mxu0 0
  %140 = vmatprep.subr.bf16.mxu0 0
  %141 = vmatpush1.bf16.msra.mxu0 0
  %142 = vmatprep.mubr.bf16.mxu0 0
  %143 = vmatmul.mubr.bf16.gmra.mrb[0].mxu0 %v58
  %v144 = vpop.f32.mrb[0].mxu0
  %v145 = vadd.f32 0.0, %v144
  %v146 = vpop.f32.mrb[0].mxu0
  %v147 = vpop.f32.mrb[0].mxu0
  %v148 = vadd.f32 0.0, %v147
  %v149 = vpop.f32.mrb[0].mxu0
  %150 = vmatprep.mubr.bf16.mxu0 0
  %151 = vmatmul.mubr.bf16.gmra.mrb[0].mxu0 %v59
  %v152 = vpop.f32.mrb[0].mxu0
  %v153 = vadd.f32 0.0, %v152
  %v154 = vpop.f32.mrb[0].mxu0
  %v155 = vpop.f32.mrb[0].mxu0
  %v156 = vadd.f32 0.0, %v155
  %v157 = vpop.f32.mrb[0].mxu0
  %158 = vdwg.mxu0
  %v159 = vadd.f32 %v26, %v145
  %v160 = vadd.f32 %v27, %v148
  %v161 = vadd.f32 %v28, %v153
  %v162 = vadd.f32 %v29, %v156
  %163 = vst [vmem:[#allocation2] sm:$0xff] %v159
  %164 = vst [vmem:[#allocation2 + $0x8] sm:$0xff] %v160
  %165 = vst [vmem:[#allocation2 + $0x10] sm:$0xff] %v161
  %166 = vst [vmem:[#allocation2 + $0x18] sm:$0xff] %v162
  // Predicated region
  $region22: #{discriminator_forward.5} parent=0 // pred_check
    %p167 = pneg %p18
  $region23: #{discriminator_forward.5} parent=0 // pred_check_branch
    %169 = sbr.rel (%p167) target = $region25
  $region24: #{discriminator_forward.5} parent=0 // pred_region
    %v170 = vld [vmem:[#allocation2] sm:$0xff]
    %v171 = vld [vmem:[#allocation2 + $0x8] sm:$0xff]
    %v172 = vld [vmem:[#allocation2 + $0x10] sm:$0xff]
    %v173 = vld [vmem:[#allocation2 + $0x18] sm:$0xff]
    %v174 = vadd.f32 %v170, %v171
    %v175 = vadd.f32 %v174, %v172
    %v176 = vadd.f32 %v175, %v173
    %v177 = vrot.slane %v176, 4
    %v178 = vadd.f32 %v176, %v177
    %v179 = vrot.slane %v178, 2
    %v180 = vadd.f32 %v178, %v179
    %v181 = vrot.slane %v180, 1
    %v182 = vadd.f32 %v180, %v181
    %v183 = vmul.f32 %v182, 0.03125
    %v184 = vsub.f32 %v170, %v183
    %v185 = vsub.f32 %v171, %v183
    %v186 = vsub.f32 %v172, %v183
    %v187 = vsub.f32 %v173, %v183
    %v188 = vmul.f32 %v184, %v184
    %v189 = vmul.f32 %v185, %v185
    %v190 = vmul.f32 %v186, %v186
    %v191 = vmul.f32 %v187, %v187
    %v192 = vadd.f32 %v188, %v189
    %v193 = vadd.f32 %v192, %v190
    %v194 = vadd.f32 %v193, %v191
    %v195 = vrot.slane %v194, 4
    %v196 = vadd.f32 %v194, %v195
    %v197 = vrot.slane %v196, 2
    %v198 = vadd.f32 %v196, %v197
    %v199 = vrot.slane %v198, 1
    %v200 = vadd.f32 %v198, %v199
    %v201 = vmul.f32 %v200, 0.03125
    %v202 = vadd.f32 %v201, 1e-05
    %v203 = vrsqrt.pop %v202
    %v204 = vmul.f32 %v184, %v203
    %v205 = vmul.f32 %v185, %v203
    %v206 = vmul.f32 %v186, %v203
    %v207 = vmul.f32 %v187, %v203
    %v208 = vld [vmem:[%s2] sm:$0x1]
    %v210 = vlaneseq
    %v211 = vshrl.u32 %v210, 7
    %v212 = vsub.s32 0, %v211
    %v213 = vrot.slane %v208, %v212
    %v215 = vmul.f32 %v204, %v213
    %v216 = vmul.f32 %v205, %v213
    %v217 = vmul.f32 %v206, %v213
    %v218 = vmul.f32 %v207, %v213
    %v219 = vld [vmem:[%s3] sm:$0x1]
    %v221 = vlaneseq
    %v222 = vshrl.u32 %v221, 7
    %v223 = vsub.s32 0, %v222
    %v224 = vrot.slane %v219, %v223
    %v226 = vadd.f32 %v215, %v224
    %v227 = vadd.f32 %v216, %v224
    %v228 = vadd.f32 %v217, %v224
    %v229 = vadd.f32 %v218, %v224
    %v230 = vmul.f32 %v226, 0.01
    %v231 = vmul.f32 %v227, 0.01
    %v232 = vmul.f32 %v228, 0.01
    %v233 = vmul.f32 %v229, 0.01
    %v234 = vmax.f32 %v226, %v230
    %v235 = vmax.f32 %v227, %v231
    %v236 = vmax.f32 %v228, %v232
    %v237 = vmax.f32 %v229, %v233
    %v238 = vpack.c.bf16 %v235, %v234
    %v239 = vpack.c.bf16 %v237, %v236
    %v242 = vunpack.c.l.b16 %v238
    %v243 = vunpack.c.h.b16 %v238
    %v244 = vunpack.c.l.b16 %v239
    %v245 = vunpack.c.h.b16 %v239
    %v246 = vpack.c.b16 %v242, %v242
    %v247 = vpack.c.b16 %v243, %v243
    %v248 = vpack.c.b16 %v244, %v244
    %v249 = vpack.c.b16 %v245, %v245
    %254 = vst [vmem:[%s4] sm:$0xf] %v246
    %255 = vst [vmem:[%s4 + $0x4] sm:$0xf] %v247
    %256 = vst [vmem:[%s4 + $0x8] sm:$0xf] %v248
    %257 = vst [vmem:[%s4 + $0xc] sm:$0xf] %v249
  $region25: #{discriminator_forward.5} parent=0 // pred_fallthru
    _
  // Predicated region
  $region26: #{discriminator_forward.5} parent=0 // pred_check
    _
  $region27: #{discriminator_forward.5} parent=0 // pred_check_branch
    %259 = sbr.rel (0) target = $region29
  $region28: #{discriminator_forward.5} parent=0 // pred_region
    _
  $region29: #{discriminator_forward.5} parent=0 // pred_fallthru
    _
  // Predicated region
  $region30: #{discriminator_forward.5} parent=0 // pred_check
    _
  $region31: #{discriminator_forward.5} parent=0 // pred_check_branch
    %261 = sbr.rel (0) target = $region33
  $region32: #{discriminator_forward.5} parent=0 // pred_region
    _
  $region33: #{discriminator_forward.5} parent=0 // pred_fallthru
    _

// kernel: discriminator_forward.6
$region0: #{discriminator_forward.6}
  #allocation0 [shape = 'u32[]', space=smem, size = 0x4, offset = 0x4, fixed_abs, tag = 'smem constant byte address 0x4 - core index']
  #allocation1 [shape = 'u32[144,128]{1,0:T(1,128)}', space=vmem, size = 0x12000, scoped, tag = 'internal scratch']
  #allocation2 [shape = 'f32[8,128]{1,0:T(8,128)}', space=vmem, size = 0x1000, scoped, tag = 'scratch operand']
  %s0 = inlined_call_operand.vmem [shape: bf16[8,256], index: 0, kind: input, shape index: {}]
  %s1 = inlined_call_operand.vmem [shape: bf16[256,128], index: 1, kind: input, shape index: {}]
  %s2 = inlined_call_operand.vmem [shape: f32[1,128], index: 2, kind: input, shape index: {}]
  %s3 = inlined_call_operand.vmem [shape: bf16[8,128], index: 3, kind: output, shape index: {}]
  %s4 = sld [smem:[#allocation0]]
  $region30: #{discriminator_forward.6} parent=0
    _
  %s6 = ssub.s32 1, %s4
  %s7 = scalar_select 0, %s6, %s4
  // Predicated region
  $region2: #{discriminator_forward.6} parent=0 // pred_check
    _
  $region3: #{discriminator_forward.6} parent=0 // pred_check_branch
    %9 = sbr.rel (0) target = $region5
  $region4: #{discriminator_forward.6} parent=0 // pred_region
    _
  $region5: #{discriminator_forward.6} parent=0 // pred_fallthru
    _
  // Predicated region
  $region6: #{discriminator_forward.6} parent=0 // pred_check
    _
  $region7: #{discriminator_forward.6} parent=0 // pred_check_branch
    %11 = sbr.rel (0) target = $region9
  $region8: #{discriminator_forward.6} parent=0 // pred_region
    _
  $region9: #{discriminator_forward.6} parent=0 // pred_fallthru
    _
  // Predicated region
  $region10: #{discriminator_forward.6} parent=0 // pred_check
    _
  $region11: #{discriminator_forward.6} parent=0 // pred_check_branch
    %13 = sbr.rel (0) target = $region13
  $region12: #{discriminator_forward.6} parent=0 // pred_region
    _
  $region13: #{discriminator_forward.6} parent=0 // pred_fallthru
    _
  %p15 = scmp.eq.s32.totalorder 0, 0
  // Predicated region
  $region14: #{discriminator_forward.6} parent=0 // pred_check
    %p16 = pneg %p15
  $region15: #{discriminator_forward.6} parent=0 // pred_check_branch
    %18 = sbr.rel (%p16) target = $region17
  $region16: #{discriminator_forward.6} parent=0 // pred_region
    %19 = vst [vmem:[#allocation2] sm:$0xff] 0.0
  $region17: #{discriminator_forward.6} parent=0 // pred_fallthru
    _
  %v20 = vld [vmem:[#allocation2] sm:$0xff]
  %v21 = vld [vmem:[%s0] sm:$0xff]
  %v22 = vld [vmem:[%s1] sm:$0xf]
  %v23 = vld [vmem:[%s1 + $0x4] sm:$0xf]
  %v24 = vld [vmem:[%s1 + $0x8] sm:$0xf]
  %v25 = vld [vmem:[%s1 + $0xc] sm:$0xf]
  %v26 = vld [vmem:[%s1 + $0x10] sm:$0xf]
  %v27 = vld [vmem:[%s1 + $0x14] sm:$0xf]
  %v28 = vld [vmem:[%s1 + $0x18] sm:$0xf]
  %v29 = vld [vmem:[%s1 + $0x1c] sm:$0xf]
  %v30 = vld [vmem:[%s1 + $0x20] sm:$0xf]
  %v31 = vld [vmem:[%s1 + $0x24] sm:$0xf]
  %v32 = vld [vmem:[%s1 + $0x28] sm:$0xf]
  %v33 = vld [vmem:[%s1 + $0x2c] sm:$0xf]
  %v34 = vld [vmem:[%s1 + $0x30] sm:$0xf]
  %v35 = vld [vmem:[%s1 + $0x34] sm:$0xf]
  %v36 = vld [vmem:[%s1 + $0x38] sm:$0xf]
  %v37 = vld [vmem:[%s1 + $0x3c] sm:$0xf]
  %v38 = vld [vmem:[%s1 + $0x40] sm:$0xf]
  %v39 = vld [vmem:[%s1 + $0x44] sm:$0xf]
  %v40 = vld [vmem:[%s1 + $0x48] sm:$0xf]
  %v41 = vld [vmem:[%s1 + $0x4c] sm:$0xf]
  %v42 = vld [vmem:[%s1 + $0x50] sm:$0xf]
  %v43 = vld [vmem:[%s1 + $0x54] sm:$0xf]
  %v44 = vld [vmem:[%s1 + $0x58] sm:$0xf]
  %v45 = vld [vmem:[%s1 + $0x5c] sm:$0xf]
  %v46 = vld [vmem:[%s1 + $0x60] sm:$0xf]
  %v47 = vld [vmem:[%s1 + $0x64] sm:$0xf]
  %v48 = vld [vmem:[%s1 + $0x68] sm:$0xf]
  %v49 = vld [vmem:[%s1 + $0x6c] sm:$0xf]
  %v50 = vld [vmem:[%s1 + $0x70] sm:$0xf]
  %v51 = vld [vmem:[%s1 + $0x74] sm:$0xf]
  %v52 = vld [vmem:[%s1 + $0x78] sm:$0xf]
  %v53 = vld [vmem:[%s1 + $0x7c] sm:$0xf]
  %v55 = vunpack.c.l.b16 %v21
  %v56 = vunpack.c.h.b16 %v21
  %v57 = vpack.c.b16 %v55, %v55
  %v58 = vpack.c.b16 %v56, %v56
  %v93 = vunpack.c.l.b16 %v22
  %v94 = vunpack.c.l.b16 %v23
  %v95 = vunpack.c.l.b16 %v24
  %v96 = vunpack.c.l.b16 %v25
  %v97 = vunpack.c.l.b16 %v26
  %v98 = vunpack.c.l.b16 %v27
  %v99 = vunpack.c.l.b16 %v28
  %v100 = vunpack.c.l.b16 %v29
  %v101 = vunpack.c.l.b16 %v30
  %v102 = vunpack.c.l.b16 %v31
  %v103 = vunpack.c.l.b16 %v32
  %v104 = vunpack.c.l.b16 %v33
  %v105 = vunpack.c.l.b16 %v34
  %v106 = vunpack.c.l.b16 %v35
  %v107 = vunpack.c.l.b16 %v36
  %v108 = vunpack.c.l.b16 %v37
  %v109 = vunpack.c.l.b16 %v38
  %v110 = vunpack.c.l.b16 %v39
  %v111 = vunpack.c.l.b16 %v40
  %v112 = vunpack.c.l.b16 %v41
  %v113 = vunpack.c.l.b16 %v42
  %v114 = vunpack.c.l.b16 %v43
  %v115 = vunpack.c.l.b16 %v44
  %v116 = vunpack.c.l.b16 %v45
  %v117 = vunpack.c.l.b16 %v46
  %v118 = vunpack.c.l.b16 %v47
  %v119 = vunpack.c.l.b16 %v48
  %v120 = vunpack.c.l.b16 %v49
  %v121 = vunpack.c.l.b16 %v50
  %v122 = vunpack.c.l.b16 %v51
  %v123 = vunpack.c.l.b16 %v52
  %v124 = vunpack.c.l.b16 %v53
  %v125 = vpack.c.b16 %v94, %v93
  %v126 = vpack.c.b16 %v96, %v95
  %v127 = vpack.c.b16 %v98, %v97
  %v128 = vpack.c.b16 %v100, %v99
  %v129 = vpack.c.b16 %v102, %v101
  %v130 = vpack.c.b16 %v104, %v103
  %v131 = vpack.c.b16 %v106, %v105
  %v132 = vpack.c.b16 %v108, %v107
  %v133 = vpack.c.b16 %v110, %v109
  %v134 = vpack.c.b16 %v112, %v111
  %v135 = vpack.c.b16 %v114, %v113
  %v136 = vpack.c.b16 %v116, %v115
  %v137 = vpack.c.b16 %v118, %v117
  %v138 = vpack.c.b16 %v120, %v119
  %v139 = vpack.c.b16 %v122, %v121
  %v140 = vpack.c.b16 %v124, %v123
  %157 = vmatprep.subr.bf16.mxu0 0
  %158 = vmatpush1.bf16.msra.mxu0 %v125
  %159 = vmatprep.subr.bf16.mxu0 0
  %160 = vmatpush1.bf16.msra.mxu0 %v126
  %161 = vmatprep.subr.bf16.mxu0 0
  %162 = vmatpush1.bf16.msra.mxu0 %v127
  %163 = vmatprep.subr.bf16.mxu0 0
  %164 = vmatpush1.bf16.msra.mxu0 %v128
  %165 = vmatprep.subr.bf16.mxu0 0
  %166 = vmatpush1.bf16.msra.mxu0 %v129
  %167 = vmatprep.subr.bf16.mxu0 0
  %168 = vmatpush1.bf16.msra.mxu0 %v130
  %169 = vmatprep.subr.bf16.mxu0 0
  %170 = vmatpush1.bf16.msra.mxu0 %v131
  %171 = vmatprep.subr.bf16.mxu0 0
  %172 = vmatpush1.bf16.msra.mxu0 %v132
  %173 = vmatprep.subr.bf16.mxu0 0
  %174 = vmatpush1.bf16.msra.mxu0 %v133
  %175 = vmatprep.subr.bf16.mxu0 0
  %176 = vmatpush1.bf16.msra.mxu0 %v134
  %177 = vmatprep.subr.bf16.mxu0 0
  %178 = vmatpush1.bf16.msra.mxu0 %v135
  %179 = vmatprep.subr.bf16.mxu0 0
  %180 = vmatpush1.bf16.msra.mxu0 %v136
  %181 = vmatprep.subr.bf16.mxu0 0
  %182 = vmatpush1.bf16.msra.mxu0 %v137
  %183 = vmatprep.subr.bf16.mxu0 0
  %184 = vmatpush1.bf16.msra.mxu0 %v138
  %185 = vmatprep.subr.bf16.mxu0 0
  %186 = vmatpush1.bf16.msra.mxu0 %v139
  %187 = vmatprep.subr.bf16.mxu0 0
  %188 = vmatpush1.bf16.msra.mxu0 %v140
  %189 = vmatprep.mubr.bf16.mxu0 %v58
  %190 = vmatmul.mubr.bf16.gmra.mrb[0].mxu0 %v57
  %v191 = vpop.f32.mrb[0].mxu0
  %v192 = vadd.f32 0.0, %v191
  %v193 = vpop.f32.mrb[0].mxu0
  %v194 = vpop.f32.mrb[0].mxu0
  %v195 = vpop.f32.mrb[0].mxu0
  %196 = vdwg.mxu0
  %v197 = vadd.f32 %v20, %v192
  %198 = vst [vmem:[#allocation2] sm:$0xff] %v197
  // Predicated region
  $region18: #{discriminator_forward.6} parent=0 // pred_check
    %p199 = pneg %p15
  $region19: #{discriminator_forward.6} parent=0 // pred_check_branch
    %201 = sbr.rel (%p199) target = $region21
  $region20: #{discriminator_forward.6} parent=0 // pred_region
    %v202 = vld [vmem:[#allocation2] sm:$0xff]
    %v203 = vld [vmem:[%s2] sm:$0x1]
    %v205 = vlaneseq
    %v206 = vshrl.u32 %v205, 7
    %v207 = vsub.s32 0, %v206
    %v208 = vrot.slane %v203, %v207
    %v210 = vadd.f32 %v202, %v208
    %v211 = vmul.f32 %v210, 0.01
    %v212 = vmax.f32 %v210, %v211
    %v213 = vpack.c.bf16 %v212, %v212
    %214 = vst [vmem:[%s3] sm:$0xf] %v213
  $region21: #{discriminator_forward.6} parent=0 // pred_fallthru
    _
  // Predicated region
  $region22: #{discriminator_forward.6} parent=0 // pred_check
    _
  $region23: #{discriminator_forward.6} parent=0 // pred_check_branch
    %216 = sbr.rel (0) target = $region25
  $region24: #{discriminator_forward.6} parent=0 // pred_region
    _
  $region25: #{discriminator_forward.6} parent=0 // pred_fallthru
    _
  // Predicated region
  $region26: #{discriminator_forward.6} parent=0 // pred_check
    _
  $region27: #{discriminator_forward.6} parent=0 // pred_check_branch
    %218 = sbr.rel (0) target = $region29
  $region28: #{discriminator_forward.6} parent=0 // pred_region
    _
  $region29: #{discriminator_forward.6} parent=0 // pred_fallthru
    _

// kernel: discriminator_forward.7
$region0: #{discriminator_forward.7}
  #allocation0 [shape = 'u32[]', space=smem, size = 0x4, offset = 0x4, fixed_abs, tag = 'smem constant byte address 0x4 - core index']
  #allocation1 [shape = 'u32[144,128]{1,0:T(1,128)}', space=vmem, size = 0x12000, scoped, tag = 'internal scratch']
  #allocation2 [shape = 'f32[2,128]{1,0:T(2,128)}', space=vmem, size = 0x400, scoped, tag = 'scratch operand']
  %s0 = inlined_call_operand.vmem [shape: bf16[2,512], index: 0, kind: input, shape index: {}]
  %s1 = inlined_call_operand.vmem [shape: bf16[512,128], index: 1, kind: input, shape index: {}]
  %s2 = inlined_call_operand.vmem [shape: f32[1,128], index: 2, kind: input, shape index: {}]
  %s3 = inlined_call_operand.vmem [shape: f32[2,128], index: 3, kind: output, shape index: {}]
  %s4 = sld [smem:[#allocation0]]
  $region53: #{discriminator_forward.7} parent=0
    _
  %s6 = ssub.s32 1, %s4
  %s7 = scalar_select 0, %s6, %s4
  loop: start=0, step=1, limit=4
  $region2: #{discriminator_forward.7} parent=0 // loop_pre_header
    _
  $region3: #{discriminator_forward.7} parent=0 // loop_header
    %s9 = sphi 0, %s13
    %p10 = scmp.ge.s32.totalorder %s9, 4
    %s16 = sphi 0, %s35
    %s17 = sphi 0, %s31
    %s18 = sphi 0, %s27
    %s19 = sphi 0, %s16
    %s20 = sphi 0, %s17
    %s21 = sphi 0, %s18
    %s22 = sphi 0, %s19
    %s23 = sphi 0, %s20
    %s24 = sphi 0, %s21
    %s40 = sphi 0, %s42
    %s43 = sphi 0, %s40
    %s44 = sphi 0, %s43
    %s60 = sphi 0, %s44
    %s68 = sphi 0, %s70
    %s71 = sphi 0, %s68
    %s72 = sphi 0, %s71
    %s88 = sphi 0, %s72
    %s94 = sphi 0, %s96
    %s97 = sphi 0, %s94
    %s98 = sphi 0, %s97
    %s114 = sphi 0, %s98
    %s122 = sphi 0, %s124
    %s125 = sphi 0, %s122
    %s126 = sphi 0, %s125
    %s142 = sphi 0, %s126
  $region4: #{discriminator_forward.7} parent=0 // loop_header_branch
    %12 = sbr.rel (%p10) target = $region8
  $region5: #{discriminator_forward.7} parent=0 // loop_body
    %s14 = ssub.s32 %s9, 1
    %s15 = ssub.s32 %s9, 2
    %s25 = sadd.s32 1, %s18
    %p26 = scmp.ge.s32.totalorder %s25, 2
    %s27 = scalar_select %p26, 0, %s25
    %s28 = sadd.s32 1, %s17
    %s29 = scalar_select %p26, %s28, %s17
    %p30 = scmp.ge.s32.totalorder %s29, 1
    %s31 = scalar_select %p30, 0, %s29
    %s32 = sadd.s32 1, %s16
    %s33 = scalar_select %p30, %s32, %s16
    %p34 = scmp.ge.s32.totalorder %s33, 1
    %s35 = scalar_select %p34, 0, %s33
    %s36 = ssub.s32 %s16, %s35
    %s37 = ssub.s32 %s18, %s27
    %s38 = sor.u32 %s36, %s37
    %p39 = scmp.eq.s32.totalorder %s38, 0
    %s41 = sadd.s32 %s40, 1
    %s42 = scalar_select %p39, %s40, %s41
    %p45 = pneg %p39
    %p46 = scmp.eq.s32.totalorder %s9, 1
    %p47 = por %p45, %p46
    %p48 = scmp.ne.s32.totalorder %s40, %s43
    %p49 = scmp.eq.s32.totalorder %s9, 0
    %p50 = por %p48, %p49
    %p51 = scmp.ne.s32.totalorder %s40, %s43
    %p52 = scmp.eq.s32.totalorder %s14, 1
    %p53 = por %p51, %p52
    %p54 = scmp.ne.s32.totalorder %s43, %s44
    %p55 = scmp.eq.s32.totalorder %s14, 0
    %p56 = por %p54, %p55
    %p57 = scmp.ne.s32.totalorder %s43, %s44
    %p58 = scmp.eq.s32.totalorder %s15, 1
    %p59 = por %p57, %p58
    %p61 = scmp.ne.s32.totalorder %s44, %s60
    %p62 = scmp.eq.s32.totalorder %s15, 0
    %p63 = por %p61, %p62
    %s64 = ssub.s32 %s18, %s27
    %s65 = ssub.s32 %s17, %s31
    %s66 = sor.u32 %s64, %s65
    %p67 = scmp.eq.s32.totalorder %s66, 0
    %s69 = sadd.s32 %s68, 1
    %s70 = scalar_select %p67, %s68, %s69
    %p73 = pneg %p67
    %p74 = scmp.eq.s32.totalorder %s9, 1
    %p75 = por %p73, %p74
    %p76 = scmp.ne.s32.totalorder %s68, %s71
    %p77 = scmp.eq.s32.totalorder %s9, 0
    %p78 = por %p76, %p77
    %p79 = scmp.ne.s32.totalorder %s68, %s71
    %p80 = scmp.eq.s32.totalorder %s14, 1
    %p81 = por %p79, %p80
    %p82 = scmp.ne.s32.totalorder %s71, %s72
    %p83 = scmp.eq.s32.totalorder %s14, 0
    %p84 = por %p82, %p83
    %p85 = scmp.ne.s32.totalorder %s71, %s72
    %p86 = scmp.eq.s32.totalorder %s15, 1
    %p87 = por %p85, %p86
    %p89 = scmp.ne.s32.totalorder %s72, %s88
    %p90 = scmp.eq.s32.totalorder %s15, 0
    %p91 = por %p89, %p90
    %s92 = ssub.s32 %s17, %s31
    %p93 = scmp.eq.s32.totalorder %s92, 0
    %s95 = sadd.s32 %s94, 1
    %s96 = scalar_select %p93, %s94, %s95
    %p99 = pneg %p93
    %p100 = scmp.eq.s32.totalorder %s9, 1
    %p101 = por %p99, %p100
    %p102 = scmp.ne.s32.totalorder %s94, %s97
    %p103 = scmp.eq.s32.totalorder %s9, 0
    %p104 = por %p102, %p103
    %p105 = scmp.ne.s32.totalorder %s94, %s97
    %p106 = scmp.eq.s32.totalorder %s14, 1
    %p107 = por %p105, %p106
    %p108 = scmp.ne.s32.totalorder %s97, %s98
    %p109 = scmp.eq.s32.totalorder %s14, 0
    %p110 = por %p108, %p109
    %p111 = scmp.ne.s32.totalorder %s97, %s98
    %p112 = scmp.eq.s32.totalorder %s15, 1
    %p113 = por %p111, %p112
    %p115 = scmp.ne.s32.totalorder %s98, %s114
    %p116 = scmp.eq.s32.totalorder %s15, 0
    %p117 = por %p115, %p116
    %s118 = ssub.s32 %s16, %s35
    %s119 = ssub.s32 %s17, %s31
    %s120 = sor.u32 %s118, %s119
    %p121 = scmp.eq.s32.totalorder %s120, 0
    %s123 = sadd.s32 %s122, 1
    %s124 = scalar_select %p121, %s122, %s123
    %p127 = pneg %p121
    %p128 = scmp.eq.s32.totalorder %s9, 1
    %p129 = por %p127, %p128
    %p130 = scmp.ne.s32.totalorder %s122, %s125
    %p131 = scmp.eq.s32.totalorder %s9, 0
    %p132 = por %p130, %p131
    %p133 = scmp.ne.s32.totalorder %s122, %s125
    %p134 = scmp.eq.s32.totalorder %s14, 1
    %p135 = por %p133, %p134
    %p136 = scmp.ne.s32.totalorder %s125, %s126
    %p137 = scmp.eq.s32.totalorder %s14, 0
    %p138 = por %p136, %p137
    %p139 = scmp.ne.s32.totalorder %s125, %s126
    %p140 = scmp.eq.s32.totalorder %s15, 1
    %p141 = por %p139, %p140
    %p143 = scmp.ne.s32.totalorder %s126, %s142
    %p144 = scmp.eq.s32.totalorder %s15, 0
    %p145 = por %p143, %p144
    %p146 = scmp.le.s32.totalorder 1, %s9
    %p147 = scmp.lt.s32.totalorder %s9, 3
    %p148 = pnand %p146, %p147
    %p149 = pneg %p148
    // Predicated region
    $region9: #{discriminator_forward.7} parent=5 // pred_check
      _
    $region10: #{discriminator_forward.7} parent=5 // pred_check_branch
      %151 = sbr.rel (%p148) target = $region12
    $region11: #{discriminator_forward.7} parent=5 // pred_region
      %s152 = ssub.s32 %s9, 1
      // Predicated region
      $region13: #{discriminator_forward.7} parent=11 // pred_check
        %p153 = pneg %p110
      $region14: #{discriminator_forward.7} parent=11 // pred_check_branch
        %155 = sbr.rel (%p153) target = $region16
      $region15: #{discriminator_forward.7} parent=11 // pred_region
        %p156 = scmp.lt.s32.totalorder %s20, 0
        %s157 = scalar_select %p156, %s20, 0
        %s158 = scalar_lea.vmem %s2, %s157
      $region16: #{discriminator_forward.7} parent=11 // pred_fallthru
        _
    $region12: #{discriminator_forward.7} parent=5 // pred_fallthru
      _
    %p159 = scmp.lt.s32.totalorder %s9, 2
    // Predicated region
    $region17: #{discriminator_forward.7} parent=5 // pred_check
      %p160 = pneg %p159
    $region18: #{discriminator_forward.7} parent=5 // pred_check_branch
      %162 = sbr.rel (%p160) target = $region20
    $region19: #{discriminator_forward.7} parent=5 // pred_region
      // Predicated region
      $region21: #{discriminator_forward.7} parent=19 // pred_check
        %p163 = pneg %p50
      $region22: #{discriminator_forward.7} parent=19 // pred_check_branch
        %165 = sbr.rel (%p163) target = $region24
      $region23: #{discriminator_forward.7} parent=19 // pred_region
        %s166 = smul.u32 2, %s18
        %p167 = scmp.lt.s32.totalorder %s16, 0
        %s168 = scalar_select %p167, %s16, 0
        %p169 = scmp.lt.s32.totalorder %s166, 3
        %s170 = scalar_select %p169, %s166, 3
        %s171 = smul.addr %s168, 4
        %s172 = sadd.s32 %s170, %s171
        %s173 = scalar_lea.vmem %s0, %s172
        %s174 = smul.u32 2, %s18
      $region24: #{discriminator_forward.7} parent=19 // pred_fallthru
        _
      // Predicated region
      $region25: #{discriminator_forward.7} parent=19 // pred_check
        %p175 = pneg %p78
      $region26: #{discriminator_forward.7} parent=19 // pred_check_branch
        %177 = sbr.rel (%p175) target = $region28
      $region27: #{discriminator_forward.7} parent=19 // pred_region
        %s178 = smul.u32 32, %s18
        %p179 = scmp.lt.s32.totalorder %s178, 63
        %s180 = scalar_select %p179, %s178, 63
        %p181 = scmp.lt.s32.totalorder %s17, 0
        %s182 = scalar_select %p181, %s17, 0
        %s183 = sadd.s32 %s182, %s180
        %s184 = smul.addr %s183, 4
        %s185 = scalar_lea.vmem %s1, %s184
        %s186 = smul.u32 32, %s18
      $region28: #{discriminator_forward.7} parent=19 // pred_fallthru
        _
    $region20: #{discriminator_forward.7} parent=5 // pred_fallthru
      _
    %p187 = scmp.le.s32.totalorder 1, %s9
    %p188 = scmp.lt.s32.totalorder %s9, 3
    %p189 = pnand %p187, %p188
    %p190 = pneg %p189
    // Predicated region
    $region29: #{discriminator_forward.7} parent=5 // pred_check
      _
    $region30: #{discriminator_forward.7} parent=5 // pred_check_branch
      %192 = sbr.rel (%p189) target = $region32
    $region31: #{discriminator_forward.7} parent=5 // pred_region
      %s193 = ssub.s32 %s9, 1
      %s194 = smul.u32 2, %s21
      %p195 = scmp.lt.s32.totalorder %s19, 0
      %s196 = scalar_select %p195, %s19, 0
      %p197 = scmp.lt.s32.totalorder %s194, 3
      %s198 = scalar_select %p197, %s194, 3
      %s199 = smul.addr %s196, 4
      %s200 = sadd.s32 %s198, %s199
      %s201 = scalar_lea.vmem %s0, %s200
      %p202 = pneg %p56
      %p203 = pneg %p53
      %s204 = smul.u32 32, %s21
      %p205 = scmp.lt.s32.totalorder %s204, 63
      %s206 = scalar_select %p205, %s204, 63
      %p207 = scmp.lt.s32.totalorder %s20, 0
      %s208 = scalar_select %p207, %s20, 0
      %s209 = sadd.s32 %s208, %s206
      %s210 = smul.addr %s209, 4
      %s211 = scalar_lea.vmem %s1, %s210
      %p212 = pneg %p84
      %p213 = pneg %p81
      %p214 = scmp.lt.s32.totalorder %s20, 0
      %s215 = scalar_select %p214, %s20, 0
      %s216 = scalar_lea.vmem %s2, %s215
      %p217 = pneg %p110
      %p218 = pneg %p107
      %p219 = pneg %p138
      %p220 = pneg %p135
      %p221 = scmp.lt.s32.totalorder %s19, 0
      %s222 = scalar_select %p221, %s19, 0
      %p223 = scmp.lt.s32.totalorder %s20, 0
      %s224 = scalar_select %p223, %s20, 0
      %s225 = sadd.s32 %s224, %s222
      %s226 = smul.addr %s225, 2
      %s227 = scalar_lea.vmem %s3, %s226
      %s228 = smul.u32 2, %s21
      %p229 = scmp.lt.s32.totalorder %s19, 0
      %s230 = scalar_select %p229, %s19, 0
      %p231 = scmp.lt.s32.totalorder %s228, 3
      %s232 = scalar_select %p231, %s228, 3
      %s233 = smul.addr %s230, 4
      %s234 = sadd.s32 %s232, %s233
      %s235 = scalar_lea.vmem %s0, %s234
      %s236 = smul.u32 2, %s21
      %s237 = smul.u32 32, %s21
      %p238 = scmp.lt.s32.totalorder %s237, 63
      %s239 = scalar_select %p238, %s237, 63
      %p240 = scmp.lt.s32.totalorder %s20, 0
      %s241 = scalar_select %p240, %s20, 0
      %s242 = sadd.s32 %s241, %s239
      %s243 = smul.addr %s242, 4
      %s244 = scalar_lea.vmem %s1, %s243
      %s245 = smul.u32 32, %s21
      %p246 = scmp.lt.s32.totalorder %s20, 0
      %s247 = scalar_select %p246, %s20, 0
      %s248 = scalar_lea.vmem %s2, %s247
      %p249 = scmp.lt.s32.totalorder %s19, 0
      %s250 = scalar_select %p249, %s19, 0
      %p251 = scmp.lt.s32.totalorder %s20, 0
      %s252 = scalar_select %p251, %s20, 0
      %s253 = sadd.s32 %s252, %s250
      %s254 = smul.addr %s253, 2
      %s255 = scalar_lea.vmem %s3, %s254
      %p257 = scmp.eq.s32.totalorder %s21, 0
      // Predicated region
      $region33: #{discriminator_forward.7} parent=31 // pred_check
        %p258 = pneg %p257
      $region34: #{discriminator_forward.7} parent=31 // pred_check_branch
        %260 = sbr.rel (%p258) target = $region36
      $region35: #{discriminator_forward.7} parent=31 // pred_region
        %261 = vst [vmem:[#allocation2] sm:$0x3] 0.0
      $region36: #{discriminator_forward.7} parent=31 // pred_fallthru
        _
      %v262 = vld [vmem:[#allocation2] sm:$0x3]
      %v263 = vld [vmem:[%s235] sm:$0x3]
      %v264 = vld [vmem:[%s244] sm:$0xf]
      %v265 = vld [vmem:[%s244 + $0x4] sm:$0xf]
      %v266 = vld [vmem:[%s244 + $0x8] sm:$0xf]
      %v267 = vld [vmem:[%s244 + $0xc] sm:$0xf]
      %v268 = vld [vmem:[%s244 + $0x10] sm:$0xf]
      %v269 = vld [vmem:[%s244 + $0x14] sm:$0xf]
      %v270 = vld [vmem:[%s244 + $0x18] sm:$0xf]
      %v271 = vld [vmem:[%s244 + $0x1c] sm:$0xf]
      %v272 = vld [vmem:[%s244 + $0x20] sm:$0xf]
      %v273 = vld [vmem:[%s244 + $0x24] sm:$0xf]
      %v274 = vld [vmem:[%s244 + $0x28] sm:$0xf]
      %v275 = vld [vmem:[%s244 + $0x2c] sm:$0xf]
      %v276 = vld [vmem:[%s244 + $0x30] sm:$0xf]
      %v277 = vld [vmem:[%s244 + $0x34] sm:$0xf]
      %v278 = vld [vmem:[%s244 + $0x38] sm:$0xf]
      %v279 = vld [vmem:[%s244 + $0x3c] sm:$0xf]
      %v280 = vld [vmem:[%s244 + $0x40] sm:$0xf]
      %v281 = vld [vmem:[%s244 + $0x44] sm:$0xf]
      %v282 = vld [vmem:[%s244 + $0x48] sm:$0xf]
      %v283 = vld [vmem:[%s244 + $0x4c] sm:$0xf]
      %v284 = vld [vmem:[%s244 + $0x50] sm:$0xf]
      %v285 = vld [vmem:[%s244 + $0x54] sm:$0xf]
      %v286 = vld [vmem:[%s244 + $0x58] sm:$0xf]
      %v287 = vld [vmem:[%s244 + $0x5c] sm:$0xf]
      %v288 = vld [vmem:[%s244 + $0x60] sm:$0xf]
      %v289 = vld [vmem:[%s244 + $0x64] sm:$0xf]
      %v290 = vld [vmem:[%s244 + $0x68] sm:$0xf]
      %v291 = vld [vmem:[%s244 + $0x6c] sm:$0xf]
      %v292 = vld [vmem:[%s244 + $0x70] sm:$0xf]
      %v293 = vld [vmem:[%s244 + $0x74] sm:$0xf]
      %v294 = vld [vmem:[%s244 + $0x78] sm:$0xf]
      %v295 = vld [vmem:[%s244 + $0x7c] sm:$0xf]
      %v298 = vunpack.c.l.s4 1966171168
      %v299 = vunpack.c.0.s8 %v298
      %v300 = vlaneseq
      %v301 = vshrl.u32 %v300, 7
      %v302 = vsub.s32 %v299, %v301
      %v303 = vrot.slane %v263, %v302
      %v304 = vcombine.high %v303, %v303
      %v306 = vunpack.c.l.s4 1966171168
      %v307 = vunpack.c.0.s8 %v306
      %v308 = vlaneseq
      %v309 = vshrl.u32 %v308, 7
      %v310 = vsub.s32 %v307, %v309
      %v311 = vrot.slane %v303, %v310
      %v313 = vunpack.c.l.s4 1966171168
      %v314 = vunpack.c.0.s8 %v313
      %v315 = vlaneseq
      %v316 = vshrl.u32 %v315, 7
      %v317 = vsub.s32 %v314, %v316
      %v318 = vrot.slane %v304, %v317
      %v353 = vunpack.c.l.b16 %v264
      %v354 = vunpack.c.l.b16 %v265
      %v355 = vunpack.c.l.b16 %v266
      %v356 = vunpack.c.l.b16 %v267
      %v357 = vunpack.c.l.b16 %v268
      %v358 = vunpack.c.l.b16 %v269
      %v359 = vunpack.c.l.b16 %v270
      %v360 = vunpack.c.l.b16 %v271
      %v361 = vunpack.c.l.b16 %v272
      %v362 = vunpack.c.l.b16 %v273
      %v363 = vunpack.c.l.b16 %v274
      %v364 = vunpack.c.l.b16 %v275
      %v365 = vunpack.c.l.b16 %v276
      %v366 = vunpack.c.l.b16 %v277
      %v367 = vunpack.c.l.b16 %v278
      %v368 = vunpack.c.l.b16 %v279
      %v369 = vunpack.c.l.b16 %v280
      %v370 = vunpack.c.l.b16 %v281
      %v371 = vunpack.c.l.b16 %v282
      %v372 = vunpack.c.l.b16 %v283
      %v373 = vunpack.c.l.b16 %v284
      %v374 = vunpack.c.l.b16 %v285
      %v375 = vunpack.c.l.b16 %v286
      %v376 = vunpack.c.l.b16 %v287
      %v377 = vunpack.c.l.b16 %v288
      %v378 = vunpack.c.l.b16 %v289
      %v379 = vunpack.c.l.b16 %v290
      %v380 = vunpack.c.l.b16 %v291
      %v381 = vunpack.c.l.b16 %v292
      %v382 = vunpack.c.l.b16 %v293
      %v383 = vunpack.c.l.b16 %v294
      %v384 = vunpack.c.l.b16 %v295
      %v385 = vpack.c.b16 %v354, %v353
      %v386 = vpack.c.b16 %v356, %v355
      %v387 = vpack.c.b16 %v358, %v357
      %v388 = vpack.c.b16 %v360, %v359
      %v389 = vpack.c.b16 %v362, %v361
      %v390 = vpack.c.b16 %v364, %v363
      %v391 = vpack.c.b16 %v366, %v365
      %v392 = vpack.c.b16 %v368, %v367
      %v393 = vpack.c.b16 %v370, %v369
      %v394 = vpack.c.b16 %v372, %v371
      %v395 = vpack.c.b16 %v374, %v373
      %v396 = vpack.c.b16 %v376, %v375
      %v397 = vpack.c.b16 %v378, %v377
      %v398 = vpack.c.b16 %v380, %v379
      %v399 = vpack.c.b16 %v382, %v381
      %v400 = vpack.c.b16 %v384, %v383
      %417 = vmatprep.subr.bf16.mxu0 0
      %418 = vmatpush1.bf16.msra.mxu0 %v385
      %419 = vmatprep.subr.bf16.mxu0 0
      %420 = vmatpush1.bf16.msra.mxu0 %v386
      %421 = vmatprep.subr.bf16.mxu0 0
      %422 = vmatpush1.bf16.msra.mxu0 %v387
      %423 = vmatprep.subr.bf16.mxu0 0
      %424 = vmatpush1.bf16.msra.mxu0 %v388
      %425 = vmatprep.subr.bf16.mxu0 0
      %426 = vmatpush1.bf16.msra.mxu0 %v389
      %427 = vmatprep.subr.bf16.mxu0 0
      %428 = vmatpush1.bf16.msra.mxu0 %v390
      %429 = vmatprep.subr.bf16.mxu0 0
      %430 = vmatpush1.bf16.msra.mxu0 %v391
      %431 = vmatprep.subr.bf16.mxu0 0
      %432 = vmatpush1.bf16.msra.mxu0 %v392
      %433 = vmatprep.subr.bf16.mxu0 0
      %434 = vmatpush1.bf16.msra.mxu0 %v393
      %435 = vmatprep.subr.bf16.mxu0 0
      %436 = vmatpush1.bf16.msra.mxu0 %v394
      %437 = vmatprep.subr.bf16.mxu0 0
      %438 = vmatpush1.bf16.msra.mxu0 %v395
      %439 = vmatprep.subr.bf16.mxu0 0
      %440 = vmatpush1.bf16.msra.mxu0 %v396
      %441 = vmatprep.subr.bf16.mxu0 0
      %442 = vmatpush1.bf16.msra.mxu0 %v397
      %443 = vmatprep.subr.bf16.mxu0 0
      %444 = vmatpush1.bf16.msra.mxu0 %v398
      %445 = vmatprep.subr.bf16.mxu0 0
      %446 = vmatpush1.bf16.msra.mxu0 %v399
      %447 = vmatprep.subr.bf16.mxu0 0
      %448 = vmatpush1.bf16.msra.mxu0 %v400
      %449 = vmatprep.mubr.bf16.mxu0 %v318
      %450 = vmatmul.mubr.bf16.gmra.mrb[0].mxu0 %v311
      %v451 = vpop.f32.mrb[0].mxu0
      %v452 = vadd.f32 0.0, %v451
      %v453 = vpop.f32.mrb[0].mxu0
      %v454 = vpop.f32.mrb[0].mxu0
      %v455 = vpop.f32.mrb[0].mxu0
      %456 = vdwg.mxu0
      %v457 = vadd.f32 %v262, %v452
      %458 = vst [vmem:[#allocation2] sm:$0x3] %v457
      %p459 = scmp.eq.s32.totalorder %s21, 1
      // Predicated region
      $region37: #{discriminator_forward.7} parent=31 // pred_check
        %p460 = pneg %p459
      $region38: #{discriminator_forward.7} parent=31 // pred_check_branch
        %462 = sbr.rel (%p460) target = $region40
      $region39: #{discriminator_forward.7} parent=31 // pred_region
        %v463 = vld [vmem:[#allocation2] sm:$0x3]
        %v464 = vld [vmem:[%s248] sm:$0x1]
        %v466 = vlaneseq
        %v467 = vshrl.u32 %v466, 7
        %v468 = vsub.s32 0, %v467
        %v469 = vrot.slane %v464, %v468
        %v471 = vadd.f32 %v463, %v469
        %v472 = vxor.u32 %v471, 2147483648
        %v473 = vmul.f32 %v472, 1.442695
        %v474 = vpow.pop %v473
        %v475 = vadd.f32 %v474, 1.0
        %v476 = vrcp.pop %v475
        %v477 = vmul.f32 1.0, %v476
        %478 = vst [vmem:[%s255] sm:$0x3] %v477
      $region40: #{discriminator_forward.7} parent=31 // pred_fallthru
        _
      %p479 = scmp.lt.s32.totalorder %s19, 0
      %s480 = scalar_select %p479, %s19, 0
      %p481 = scmp.lt.s32.totalorder %s20, 0
      %s482 = scalar_select %p481, %s20, 0
      %s483 = sadd.s32 %s482, %s480
      %s484 = smul.addr %s483, 2
      %s485 = scalar_lea.vmem %s3, %s484
      // Predicated region
      $region41: #{discriminator_forward.7} parent=31 // pred_check
        %p486 = pneg %p135
      $region42: #{discriminator_forward.7} parent=31 // pred_check_branch
        %488 = sbr.rel (%p486) target = $region44
      $region43: #{discriminator_forward.7} parent=31 // pred_region
        _
      $region44: #{discriminator_forward.7} parent=31 // pred_fallthru
        _
      // Predicated region
      $region45: #{discriminator_forward.7} parent=31 // pred_check
        %p489 = pneg %p135
      $region46: #{discriminator_forward.7} parent=31 // pred_check_branch
        %491 = sbr.rel (%p489) target = $region48
      $region47: #{discriminator_forward.7} parent=31 // pred_region
        %p492 = scmp.lt.s32.totalorder %s19, 0
        %s493 = scalar_select %p492, %s19, 0
        %p494 = scmp.lt.s32.totalorder %s20, 0
        %s495 = scalar_select %p494, %s20, 0
        %s496 = sadd.s32 %s495, %s493
        %s497 = smul.addr %s496, 2
        %s498 = scalar_lea.vmem %s3, %s497
      $region48: #{discriminator_forward.7} parent=31 // pred_fallthru
        _
    $region32: #{discriminator_forward.7} parent=5 // pred_fallthru
      _
    %p499 = scmp.le.s32.totalorder 2, %s9
    // Predicated region
    $region49: #{discriminator_forward.7} parent=5 // pred_check
      %p500 = pneg %p499
    $region50: #{discriminator_forward.7} parent=5 // pred_check_branch
      %502 = sbr.rel (%p500) target = $region52
    $region51: #{discriminator_forward.7} parent=5 // pred_region
      %s503 = ssub.s32 %s9, 2
    $region52: #{discriminator_forward.7} parent=5 // pred_fallthru
      _
  $region6: #{discriminator_forward.7} parent=0 // loop_footer
    %s13 = sadd.s32 1, %s9
  $region7: #{discriminator_forward.7} parent=0 // loop_footer_branch
    %8 = sbr.rel target = $region3
  $region8: #{discriminator_forward.7} parent=0 // loop_exit
    _

</llo_original>
